<compile_context>
chip_gen: v5e
topology: v5e:2x2
jax: 0.10.0
libtpu: 0.0.40
codegen_flags: <defaults>
</compile_context>

<pallas_src>
import jax
import jax.numpy as jnp
from jax import lax
from jax.experimental import pallas as pl
from jax.experimental.pallas import tpu as pltpu

EPS = 1e-5
LANE = 128


def _round_up(x, m):
    return (x + m - 1) // m * m


# ---------------------------------------------------------------- in-kernel helpers
def _shift_h(a, dy):
    # a: (H, W, C); returns b with b[i, j] = a[i + dy, j] (zero outside range).
    if dy == 0:
        return a
    z = jnp.zeros((1,) + a.shape[1:], a.dtype)
    if dy == 1:
        return jnp.concatenate([a[1:], z], axis=0)
    return jnp.concatenate([z, a[:-1]], axis=0)


def _shift_w(a, dx):
    # a: (H, W, C); returns b with b[i, j] = a[i, j + dx] (zero outside range).
    if dx == 0:
        return a
    z = jnp.zeros((a.shape[0], 1, a.shape[2]), a.dtype)
    if dx == 1:
        return jnp.concatenate([a[:, 1:], z], axis=1)
    return jnp.concatenate([z, a[:, :-1]], axis=1)


def _conv3x3_taps(a, w_ref):
    """3x3 'same' conv as 9 accumulated MXU matmuls over bf16 shifted views.

    a: (H, W, C) bf16 activation; w_ref: (9, C, Co) bf16 weight ref, tap order (ky, kx).
    Returns the f32 accumulator of shape (H*W, Co).
    """
    H, W, C = a.shape
    Co = w_ref.shape[-1]
    M = H * W
    shifted_w = {dx: _shift_w(a, dx) for dx in (-1, 0, 1)}      # only 2 real bf16 copies
    acc = jnp.zeros((M, Co), jnp.float32)
    tap = 0
    for dy in (-1, 0, 1):
        for dx in (-1, 0, 1):
            sh = _shift_h(shifted_w[dx], dy).reshape(M, C)      # bf16 shifted view
            acc = acc + jnp.dot(sh, w_ref[tap], preferred_element_type=jnp.float32)
            tap += 1
    return acc


def _partial_stats(acc):
    # acc: (M, C) f32 -> (8, C) f32, rows = [mean, M2 (centered sum of squares), 0...].
    mean = jnp.mean(acc, axis=0, keepdims=True)
    d = acc - mean
    m2 = jnp.sum(d * d, axis=0, keepdims=True)
    pad = jnp.zeros((6, acc.shape[1]), jnp.float32)
    return jnp.concatenate([mean, m2, pad], axis=0)


# ---------------------------------------------------------------- kernels
def _conv1_kernel(x_ref, w_ref, y_ref, st_ref):
    # x_ref: (1, H, W, Ci) bf16 ; w_ref: (9, Ci, Co) bf16
    _, H, W, _ = x_ref.shape
    Co = y_ref.shape[-1]
    acc = _conv3x3_taps(x_ref[0], w_ref)                  # x stays bf16; no f32 round trip
    # conv1 bias omitted: cancels exactly against the following batch-stats BN.
    st_ref[0] = _partial_stats(acc)
    y_ref[...] = acc.reshape(1, H, W, Co).astype(y_ref.dtype)


def _conv2_kernel(y1_ref, s1_ref, t1_ref, w_ref, y2_ref, st_ref):
    # y1_ref: (1, H, W, C) bf16 ; s1/t1: (1, C) f32 folded BN1 scale/shift ; w_ref: (9, C, C)
    _, H, W, _ = y1_ref.shape
    Co = y2_ref.shape[-1]
    y = y1_ref[0].astype(jnp.float32) * s1_ref[...] + t1_ref[...]    # bn1 (f32 math)
    y = jnp.maximum(y, 0.0).astype(jnp.bfloat16)                     # relu, bf16 BEFORE taps
    acc = _conv3x3_taps(y, w_ref)
    # conv2 bias omitted: cancels exactly against BN2.
    st_ref[0] = _partial_stats(acc)
    y2_ref[...] = acc.reshape(1, H, W, Co).astype(y2_ref.dtype)


def _bn2_skip_kernel(y2_ref, x_ref, ws_ref, s2_ref, t2_ref, bs_ref, o_ref):
    # y2_ref: (1, H, W, Co) bf16 ; x_ref: (1, H, W, Ci) bf16 ; ws_ref: (Ci, Co) bf16
    _, H, W, Ci = x_ref.shape
    Co = o_ref.shape[-1]
    z = y2_ref[0].astype(jnp.float32) * s2_ref[...] + t2_ref[...]    # bn2
    xs = x_ref[0].reshape(H * W, Ci)                                 # bf16 skip operand
    skip = jnp.dot(xs, ws_ref[...], preferred_element_type=jnp.float32) + bs_ref[...]
    out = jnp.maximum(z + skip.reshape(H, W, Co), 0.0)
    o_ref[...] = out.reshape(1, H, W, Co).astype(o_ref.dtype)        # bf16 lane-dense store


# ---------------------------------------------------------------- specs / compiler params
def _img_spec(H, W, C):
    return pl.BlockSpec((1, H, W, C), lambda n: (n, 0, 0, 0))


def _full_spec(shape):
    zeros = (0,) * len(shape)
    return pl.BlockSpec(tuple(shape), lambda n: zeros)


def _conv_pass_vmem(H, W, Cin_p, Cout_p):
    # Double-buffered blocks (bf16) + in-kernel intermediates (bf16 shift copies, f32 acc).
    m = H * W
    blocks = (2 * 2 * m * Cin_p            # input activation block
              + 2 * 2 * 9 * Cin_p * Cout_p  # 3x3 weight block
              + 2 * 2 * m * Cout_p          # output activation block
              + 2 * 4 * 8 * Cout_p)         # stats block (f32)
    interm = (4 * 2 * m * Cin_p             # bf16 W-shift copies + one live H-shifted tap
              + 4 * m * Cin_p               # f32 bn intermediate (pass 2; over-estimate pass 1)
              + 2 * 4 * m * Cout_p)         # f32 accumulator + one matmul result
    return blocks + interm


def _pass3_vmem(H, W, Ci, Co):
    m = H * W
    blocks = 2 * 2 * m * Co + 2 * 2 * m * Ci + 2 * 2 * Ci * Co + 2 * 2 * m * Co
    interm = 3 * 4 * m * Co
    return blocks + interm


def _params(vmem_estimate_bytes):
    # +30% headroom, floor at the v5e default (16 MiB), cap at v7x physical VMEM (64 MiB).
    limit = int(vmem_estimate_bytes * 1.3) + (1 << 20)
    limit = min(max(limit, 16 << 20), 64 << 20)
    return pltpu.CompilerParams(dimension_semantics=("parallel",),
                                vmem_limit_bytes=limit)


# ---------------------------------------------------------------- stat merge / BN folding
def _combine_stats(st, count_per_tile):
    # st: (T, 8, C) per-tile [mean, M2]; equal counts -> parallel-variance merge (biased var).
    means = st[:, 0, :]
    m2 = st[:, 1, :]
    gmean = jnp.mean(means, axis=0)
    total = count_per_tile * st.shape[0]
    gm2 = jnp.sum(m2, axis=0) + count_per_tile * jnp.sum((means - gmean) ** 2, axis=0)
    return gmean, gm2 / total


def _affine(gamma, beta, mean, var):
    s = gamma * lax.rsqrt(var + EPS)
    t = beta - mean * s
    return s.reshape(1, -1).astype(jnp.float32), t.reshape(1, -1).astype(jnp.float32)


# ---------------------------------------------------------------- wrapper
def resblock_forward(x_nchw, w1, b1, g1, be1, w2, b2, g2, be2, ws, bs):
    """x: (N, Cin, H, W); conv weights in PyTorch OIHW; returns (N, Cout, H, W) f32."""
    del b1, b2  # conv biases followed by training-mode BN cancel exactly
    N, Cin, H, W = x_nchw.shape
    Cout = w1.shape[0]
    Ci = _round_up(Cin, LANE)
    Co = _round_up(Cout, LANE)

    # ---- layout glue (plain JAX): NCHW -> NHWC, lane-pad channels (no-op when aligned).
    x = jnp.transpose(x_nchw, (0, 2, 3, 1)).astype(jnp.bfloat16)
    if Ci != Cin:
        x = jnp.pad(x, ((0, 0), (0, 0), (0, 0), (0, Ci - Cin)))

    def conv3_w(w, cip, cop):
        co, ci = w.shape[0], w.shape[1]
        wk = jnp.transpose(w, (2, 3, 1, 0)).astype(jnp.float32)          # (3,3,ci,co)
        wk = jnp.zeros((3, 3, cip, cop), jnp.float32).at[:, :, :ci, :co].set(wk)
        return wk.reshape(9, cip, cop).astype(jnp.bfloat16)              # tap-major

    w1k = conv3_w(w1, Ci, Co)                                            # (9, Ci, Co)
    w2k = conv3_w(w2, Co, Co)                                            # (9, Co, Co)
    wsk = jnp.zeros((Ci, Co), jnp.float32).at[:Cin, :Cout].set(
        jnp.transpose(ws[:, :, 0, 0], (1, 0)).astype(jnp.float32)).astype(jnp.bfloat16)
    padc = lambda v: jnp.zeros((Co,), jnp.float32).at[:Cout].set(v.astype(jnp.float32))
    g1p, be1p, g2p, be2p, bsp = map(padc, (g1, be1, g2, be2, bs))

    stats_spec = pl.BlockSpec((1, 8, Co), lambda n: (n, 0, 0))

    # ---- pass 1: conv1 + per-image partial BN stats
    y1, st1 = pl.pallas_call(
        _conv1_kernel,
        out_shape=(jax.ShapeDtypeStruct((N, H, W, Co), jnp.bfloat16),
                   jax.ShapeDtypeStruct((N, 8, Co), jnp.float32)),
        grid=(N,),
        in_specs=[_img_spec(H, W, Ci), _full_spec((9, Ci, Co))],
        out_specs=(_img_spec(H, W, Co), stats_spec),
        compiler_params=_params(_conv_pass_vmem(H, W, Ci, Co)),
    )(x, w1k)

    mu1, var1 = _combine_stats(st1, H * W)
    s1, t1 = _affine(g1p, be1p, mu1, var1)

    # ---- pass 2: bn1 + relu + conv2 + partial BN stats
    y2, st2 = pl.pallas_call(
        _conv2_kernel,
        out_shape=(jax.ShapeDtypeStruct((N, H, W, Co), jnp.bfloat16),
                   jax.ShapeDtypeStruct((N, 8, Co), jnp.float32)),
        grid=(N,),
        in_specs=[_img_spec(H, W, Co), _full_spec(s1.shape), _full_spec(t1.shape),
                  _full_spec((9, Co, Co))],
        out_specs=(_img_spec(H, W, Co), stats_spec),
        compiler_params=_params(_conv_pass_vmem(H, W, Co, Co)),
    )(y1, s1, t1, w2k)

    mu2, var2 = _combine_stats(st2, H * W)
    s2, t2 = _affine(g2p, be2p, mu2, var2)
    bsr = bsp.reshape(1, -1)

    # ---- pass 3: bn2 + 1x1 skip conv + add + relu (bf16 lane-dense output store)
    out = pl.pallas_call(
        _bn2_skip_kernel,
        out_shape=jax.ShapeDtypeStruct((N, H, W, Co), jnp.bfloat16),
        grid=(N,),
        in_specs=[_img_spec(H, W, Co), _img_spec(H, W, Ci), _full_spec(wsk.shape),
                  _full_spec(s2.shape), _full_spec(t2.shape), _full_spec(bsr.shape)],
        out_specs=_img_spec(H, W, Co),
        compiler_params=_params(_pass3_vmem(H, W, Ci, Co)),
    )(y2, x, wsk, s2, t2, bsr)

    return jnp.transpose(out[..., :Cout], (0, 3, 1, 2)).astype(jnp.float32)


# ---------------------------------------------------------------- pure-JAX reference
def resblock_ref(x, w1, b1, g1, be1, w2, b2, g2, be2, ws, bs):
    """f32 NCHW reference mirroring the PyTorch forward (training-mode BN)."""
    def conv(x, w, b, pad):
        y = lax.conv_general_dilated(x, w, (1, 1), [(pad, pad), (pad, pad)],
                                     dimension_numbers=("NCHW", "OIHW", "NCHW"))
        return y + b[None, :, None, None]

    def bn(y, g, be):
        mu = jnp.mean(y, axis=(0, 2, 3), keepdims=True)
        var = jnp.mean((y - mu) ** 2, axis=(0, 2, 3), keepdims=True)
        return (y - mu) * lax.rsqrt(var + EPS) * g[None, :, None, None] + be[None, :, None, None]

    y = jax.nn.relu(bn(conv(x, w1, b1, 1), g1, be1))
    y = bn(conv(y, w2, b2, 1), g2, be2)
    return jax.nn.relu(y + conv(x, ws, bs, 0))


if __name__ == "__main__":
    key = jax.random.PRNGKey(0)
    N, Cin, Cout, H, W = 2, 4, 8, 16, 16
    ks = jax.random.split(key, 11)

    x = jax.random.normal(ks[0], (N, Cin, H, W), jnp.float32)
    w1 = 0.1 * jax.random.normal(ks[1], (Cout, Cin, 3, 3), jnp.float32)
    b1 = 0.1 * jax.random.normal(ks[2], (Cout,), jnp.float32)
    w2 = 0.1 * jax.random.normal(ks[3], (Cout, Cout, 3, 3), jnp.float32)
    b2 = 0.1 * jax.random.normal(ks[4], (Cout,), jnp.float32)
    g1 = 1.0 + 0.1 * jax.random.normal(ks[5], (Cout,), jnp.float32)
    be1 = 0.1 * jax.random.normal(ks[6], (Cout,), jnp.float32)
    g2 = 1.0 + 0.1 * jax.random.normal(ks[7], (Cout,), jnp.float32)
    be2 = 0.1 * jax.random.normal(ks[8], (Cout,), jnp.float32)
    ws = 0.1 * jax.random.normal(ks[9], (Cout, Cin, 1, 1), jnp.float32)
    bs = 0.1 * jax.random.normal(ks[10], (Cout,), jnp.float32)

    out = resblock_forward(x, w1, b1, g1, be1, w2, b2, g2, be2, ws, bs)
    jax.block_until_ready(out)

    ref = resblock_ref(x, w1, b1, g1, be1, w2, b2, g2, be2, ws, bs)
    assert out.shape == (N, Cout, H, W)
    # bf16 MXU operands / bf16 activation stores (f32 accumulation) => compare against the
    # f32 reference with a tolerance covering bf16 rounding through two convs + BN.
    err = float(jnp.max(jnp.abs(out - ref)))
    assert jnp.allclose(out, ref, atol=5e-2, rtol=5e-2), err
    print("KERNEL_OK")
</pallas_src>

<mosaic_0001>
module attributes {stable_mosaic.version = 11 : i64} {
  func.func @_conv1_kernel(%arg0: i32, %arg1: memref<1x16x16x128xbf16, #tpu.memory_space<vmem>>, %arg2: memref<9x128x128xbf16, #tpu.memory_space<vmem>>, %arg3: memref<1x16x16x128xbf16, #tpu.memory_space<vmem>>, %arg4: memref<1x8x128xf32, #tpu.memory_space<vmem>>) attributes {dimension_semantics = [#tpu.dimension_semantics<parallel>], iteration_bounds = array<i64: 2>, scalar_prefetch = 0 : i64, scratch_operands = 0 : i64, tpu.core_type = #tpu.core_type<tc>, window_params = [{transform_indices = @transform_0, window_bounds = array<i64: 1, 16, 16, 128>}, {pipeline_mode = #tpu.pipeline_mode<synchronous>, transform_indices = @transform_1, window_bounds = array<i64: 9, 128, 128>}, {transform_indices = @transform_2, window_bounds = array<i64: 1, 16, 16, 128>}, {transform_indices = @transform_3, window_bounds = array<i64: 1, 8, 128>}]} {
    %c0 = arith.constant 0 : index
    %c0_0 = arith.constant 0 : index
    %c0_1 = arith.constant 0 : index
    %c0_2 = arith.constant 0 : index
    %0 = vector.load %arg1[%c0, %c0_0, %c0_1, %c0_2] : memref<1x16x16x128xbf16, #tpu.memory_space<vmem>>, vector<1x16x16x128xbf16>
    %1 = vector.shape_cast %0 : vector<1x16x16x128xbf16> to vector<16x16x128xbf16>
    %cst = arith.constant 0.000000e+00 : bf16
    %2 = vector.broadcast %cst : bf16 to vector<16x1x128xbf16>
    %3 = vector.extract_strided_slice %1 {offsets = [0, 0, 0], sizes = [16, 15, 128], strides = [1, 1, 1]} : vector<16x16x128xbf16> to vector<16x15x128xbf16>
    %4 = tpu.concatenate %2, %3 in 1 : vector<16x1x128xbf16>, vector<16x15x128xbf16> -> vector<16x16x128xbf16>
    %cst_3 = arith.constant 0.000000e+00 : bf16
    %5 = vector.broadcast %cst_3 : bf16 to vector<16x1x128xbf16>
    %6 = vector.extract_strided_slice %1 {offsets = [0, 1, 0], sizes = [16, 15, 128], strides = [1, 1, 1]} : vector<16x16x128xbf16> to vector<16x15x128xbf16>
    %7 = tpu.concatenate %6, %5 in 1 : vector<16x15x128xbf16>, vector<16x1x128xbf16> -> vector<16x16x128xbf16>
    %cst_4 = arith.constant 0.000000e+00 : f32
    %8 = vector.broadcast %cst_4 : f32 to vector<256x128xf32>
    %cst_5 = arith.constant 0.000000e+00 : bf16
    %9 = vector.broadcast %cst_5 : bf16 to vector<1x16x128xbf16>
    %10 = vector.extract_strided_slice %4 {offsets = [0, 0, 0], sizes = [15, 16, 128], strides = [1, 1, 1]} : vector<16x16x128xbf16> to vector<15x16x128xbf16>
    %11 = tpu.concatenate %9, %10 in 0 : vector<1x16x128xbf16>, vector<15x16x128xbf16> -> vector<16x16x128xbf16>
    %12 = vector.shape_cast %11 : vector<16x16x128xbf16> to vector<256x128xbf16>
    %c0_6 = arith.constant 0 : index
    %c0_7 = arith.constant 0 : index
    %c0_8 = arith.constant 0 : index
    %13 = vector.load %arg2[%c0_6, %c0_7, %c0_8] : memref<9x128x128xbf16, #tpu.memory_space<vmem>>, vector<1x128x128xbf16>
    %14 = vector.shape_cast %13 : vector<1x128x128xbf16> to vector<128x128xbf16>
    %cst_9 = arith.constant dense<0.000000e+00> : vector<256x128xf32>
    %15 = tpu.matmul %12, %14, %cst_9 {dimension_numbers = #tpu.dot_dimension_numbers<[1], [0], [0], [1], [0, 0, 1, 1], [], []>} : vector<256x128xbf16>, vector<128x128xbf16>, vector<256x128xf32> -> vector<256x128xf32>
    %16 = arith.addf %8, %15 : vector<256x128xf32>
    %cst_10 = arith.constant 0.000000e+00 : bf16
    %17 = vector.broadcast %cst_10 : bf16 to vector<1x16x128xbf16>
    %18 = vector.extract_strided_slice %1 {offsets = [0, 0, 0], sizes = [15, 16, 128], strides = [1, 1, 1]} : vector<16x16x128xbf16> to vector<15x16x128xbf16>
    %19 = tpu.concatenate %17, %18 in 0 : vector<1x16x128xbf16>, vector<15x16x128xbf16> -> vector<16x16x128xbf16>
    %20 = vector.shape_cast %19 : vector<16x16x128xbf16> to vector<256x128xbf16>
    %c1 = arith.constant 1 : index
    %c0_11 = arith.constant 0 : index
    %c0_12 = arith.constant 0 : index
    %21 = vector.load %arg2[%c1, %c0_11, %c0_12] : memref<9x128x128xbf16, #tpu.memory_space<vmem>>, vector<1x128x128xbf16>
    %22 = vector.shape_cast %21 : vector<1x128x128xbf16> to vector<128x128xbf16>
    %cst_13 = arith.constant dense<0.000000e+00> : vector<256x128xf32>
    %23 = tpu.matmul %20, %22, %cst_13 {dimension_numbers = #tpu.dot_dimension_numbers<[1], [0], [0], [1], [0, 0, 1, 1], [], []>} : vector<256x128xbf16>, vector<128x128xbf16>, vector<256x128xf32> -> vector<256x128xf32>
    %24 = arith.addf %16, %23 : vector<256x128xf32>
    %cst_14 = arith.constant 0.000000e+00 : bf16
    %25 = vector.broadcast %cst_14 : bf16 to vector<1x16x128xbf16>
    %26 = vector.extract_strided_slice %7 {offsets = [0, 0, 0], sizes = [15, 16, 128], strides = [1, 1, 1]} : vector<16x16x128xbf16> to vector<15x16x128xbf16>
    %27 = tpu.concatenate %25, %26 in 0 : vector<1x16x128xbf16>, vector<15x16x128xbf16> -> vector<16x16x128xbf16>
    %28 = vector.shape_cast %27 : vector<16x16x128xbf16> to vector<256x128xbf16>
    %c2 = arith.constant 2 : index
    %c0_15 = arith.constant 0 : index
    %c0_16 = arith.constant 0 : index
    %29 = vector.load %arg2[%c2, %c0_15, %c0_16] : memref<9x128x128xbf16, #tpu.memory_space<vmem>>, vector<1x128x128xbf16>
    %30 = vector.shape_cast %29 : vector<1x128x128xbf16> to vector<128x128xbf16>
    %cst_17 = arith.constant dense<0.000000e+00> : vector<256x128xf32>
    %31 = tpu.matmul %28, %30, %cst_17 {dimension_numbers = #tpu.dot_dimension_numbers<[1], [0], [0], [1], [0, 0, 1, 1], [], []>} : vector<256x128xbf16>, vector<128x128xbf16>, vector<256x128xf32> -> vector<256x128xf32>
    %32 = arith.addf %24, %31 : vector<256x128xf32>
    %33 = vector.shape_cast %4 : vector<16x16x128xbf16> to vector<256x128xbf16>
    %c3 = arith.constant 3 : index
    %c0_18 = arith.constant 0 : index
    %c0_19 = arith.constant 0 : index
    %34 = vector.load %arg2[%c3, %c0_18, %c0_19] : memref<9x128x128xbf16, #tpu.memory_space<vmem>>, vector<1x128x128xbf16>
    %35 = vector.shape_cast %34 : vector<1x128x128xbf16> to vector<128x128xbf16>
    %cst_20 = arith.constant dense<0.000000e+00> : vector<256x128xf32>
    %36 = tpu.matmul %33, %35, %cst_20 {dimension_numbers = #tpu.dot_dimension_numbers<[1], [0], [0], [1], [0, 0, 1, 1], [], []>} : vector<256x128xbf16>, vector<128x128xbf16>, vector<256x128xf32> -> vector<256x128xf32>
    %37 = arith.addf %32, %36 : vector<256x128xf32>
    %38 = vector.shape_cast %1 : vector<16x16x128xbf16> to vector<256x128xbf16>
    %c4 = arith.constant 4 : index
    %c0_21 = arith.constant 0 : index
    %c0_22 = arith.constant 0 : index
    %39 = vector.load %arg2[%c4, %c0_21, %c0_22] : memref<9x128x128xbf16, #tpu.memory_space<vmem>>, vector<1x128x128xbf16>
    %40 = vector.shape_cast %39 : vector<1x128x128xbf16> to vector<128x128xbf16>
    %cst_23 = arith.constant dense<0.000000e+00> : vector<256x128xf32>
    %41 = tpu.matmul %38, %40, %cst_23 {dimension_numbers = #tpu.dot_dimension_numbers<[1], [0], [0], [1], [0, 0, 1, 1], [], []>} : vector<256x128xbf16>, vector<128x128xbf16>, vector<256x128xf32> -> vector<256x128xf32>
    %42 = arith.addf %37, %41 : vector<256x128xf32>
    %43 = vector.shape_cast %7 : vector<16x16x128xbf16> to vector<256x128xbf16>
    %c5 = arith.constant 5 : index
    %c0_24 = arith.constant 0 : index
    %c0_25 = arith.constant 0 : index
    %44 = vector.load %arg2[%c5, %c0_24, %c0_25] : memref<9x128x128xbf16, #tpu.memory_space<vmem>>, vector<1x128x128xbf16>
    %45 = vector.shape_cast %44 : vector<1x128x128xbf16> to vector<128x128xbf16>
    %cst_26 = arith.constant dense<0.000000e+00> : vector<256x128xf32>
    %46 = tpu.matmul %43, %45, %cst_26 {dimension_numbers = #tpu.dot_dimension_numbers<[1], [0], [0], [1], [0, 0, 1, 1], [], []>} : vector<256x128xbf16>, vector<128x128xbf16>, vector<256x128xf32> -> vector<256x128xf32>
    %47 = arith.addf %42, %46 : vector<256x128xf32>
    %cst_27 = arith.constant 0.000000e+00 : bf16
    %48 = vector.broadcast %cst_27 : bf16 to vector<1x16x128xbf16>
    %49 = vector.extract_strided_slice %4 {offsets = [1, 0, 0], sizes = [15, 16, 128], strides = [1, 1, 1]} : vector<16x16x128xbf16> to vector<15x16x128xbf16>
    %50 = tpu.concatenate %49, %48 in 0 : vector<15x16x128xbf16>, vector<1x16x128xbf16> -> vector<16x16x128xbf16>
    %51 = vector.shape_cast %50 : vector<16x16x128xbf16> to vector<256x128xbf16>
    %c6 = arith.constant 6 : index
    %c0_28 = arith.constant 0 : index
    %c0_29 = arith.constant 0 : index
    %52 = vector.load %arg2[%c6, %c0_28, %c0_29] : memref<9x128x128xbf16, #tpu.memory_space<vmem>>, vector<1x128x128xbf16>
    %53 = vector.shape_cast %52 : vector<1x128x128xbf16> to vector<128x128xbf16>
    %cst_30 = arith.constant dense<0.000000e+00> : vector<256x128xf32>
    %54 = tpu.matmul %51, %53, %cst_30 {dimension_numbers = #tpu.dot_dimension_numbers<[1], [0], [0], [1], [0, 0, 1, 1], [], []>} : vector<256x128xbf16>, vector<128x128xbf16>, vector<256x128xf32> -> vector<256x128xf32>
    %55 = arith.addf %47, %54 : vector<256x128xf32>
    %cst_31 = arith.constant 0.000000e+00 : bf16
    %56 = vector.broadcast %cst_31 : bf16 to vector<1x16x128xbf16>
    %57 = vector.extract_strided_slice %1 {offsets = [1, 0, 0], sizes = [15, 16, 128], strides = [1, 1, 1]} : vector<16x16x128xbf16> to vector<15x16x128xbf16>
    %58 = tpu.concatenate %57, %56 in 0 : vector<15x16x128xbf16>, vector<1x16x128xbf16> -> vector<16x16x128xbf16>
    %59 = vector.shape_cast %58 : vector<16x16x128xbf16> to vector<256x128xbf16>
    %c7 = arith.constant 7 : index
    %c0_32 = arith.constant 0 : index
    %c0_33 = arith.constant 0 : index
    %60 = vector.load %arg2[%c7, %c0_32, %c0_33] : memref<9x128x128xbf16, #tpu.memory_space<vmem>>, vector<1x128x128xbf16>
    %61 = vector.shape_cast %60 : vector<1x128x128xbf16> to vector<128x128xbf16>
    %cst_34 = arith.constant dense<0.000000e+00> : vector<256x128xf32>
    %62 = tpu.matmul %59, %61, %cst_34 {dimension_numbers = #tpu.dot_dimension_numbers<[1], [0], [0], [1], [0, 0, 1, 1], [], []>} : vector<256x128xbf16>, vector<128x128xbf16>, vector<256x128xf32> -> vector<256x128xf32>
    %63 = arith.addf %55, %62 : vector<256x128xf32>
    %cst_35 = arith.constant 0.000000e+00 : bf16
    %64 = vector.broadcast %cst_35 : bf16 to vector<1x16x128xbf16>
    %65 = vector.extract_strided_slice %7 {offsets = [1, 0, 0], sizes = [15, 16, 128], strides = [1, 1, 1]} : vector<16x16x128xbf16> to vector<15x16x128xbf16>
    %66 = tpu.concatenate %65, %64 in 0 : vector<15x16x128xbf16>, vector<1x16x128xbf16> -> vector<16x16x128xbf16>
    %67 = vector.shape_cast %66 : vector<16x16x128xbf16> to vector<256x128xbf16>
    %c8 = arith.constant 8 : index
    %c0_36 = arith.constant 0 : index
    %c0_37 = arith.constant 0 : index
    %68 = vector.load %arg2[%c8, %c0_36, %c0_37] : memref<9x128x128xbf16, #tpu.memory_space<vmem>>, vector<1x128x128xbf16>
    %69 = vector.shape_cast %68 : vector<1x128x128xbf16> to vector<128x128xbf16>
    %cst_38 = arith.constant dense<0.000000e+00> : vector<256x128xf32>
    %70 = tpu.matmul %67, %69, %cst_38 {dimension_numbers = #tpu.dot_dimension_numbers<[1], [0], [0], [1], [0, 0, 1, 1], [], []>} : vector<256x128xbf16>, vector<128x128xbf16>, vector<256x128xf32> -> vector<256x128xf32>
    %71 = arith.addf %63, %70 : vector<256x128xf32>
    %cst_39 = arith.constant dense<0.000000e+00> : vector<128xf32>
    %72 = vector.multi_reduction <add>, %71, %cst_39 [0] : vector<256x128xf32> to vector<128xf32>
    %73 = vector.shape_cast %72 : vector<128xf32> to vector<1x128xf32>
    %cst_40 = arith.constant 2.560000e+02 : f32
    %74 = vector.broadcast %cst_40 : f32 to vector<1x128xf32>
    %75 = arith.divf %73, %74 : vector<1x128xf32>
    %76 = vector.broadcast %75 : vector<1x128xf32> to vector<256x128xf32>
    %77 = arith.subf %71, %76 : vector<256x128xf32>
    %78 = arith.mulf %77, %77 : vector<256x128xf32>
    %cst_41 = arith.constant dense<0.000000e+00> : vector<128xf32>
    %79 = vector.multi_reduction <add>, %78, %cst_41 [0] : vector<256x128xf32> to vector<128xf32>
    %80 = vector.shape_cast %79 : vector<128xf32> to vector<1x128xf32>
    %cst_42 = arith.constant 0.000000e+00 : f32
    %81 = vector.broadcast %cst_42 : f32 to vector<6x128xf32>
    %82 = tpu.concatenate %75, %80, %81 in 0 : vector<1x128xf32>, vector<1x128xf32>, vector<6x128xf32> -> vector<8x128xf32>
    %c0_43 = arith.constant 0 : index
    %c0_44 = arith.constant 0 : index
    %c0_45 = arith.constant 0 : index
    %83 = vector.load %arg4[%c0_43, %c0_44, %c0_45] : memref<1x8x128xf32, #tpu.memory_space<vmem>>, vector<1x8x128xf32>
    %84 = vector.shape_cast %83 : vector<1x8x128xf32> to vector<8x128xf32>
    %85 = vector.shape_cast %82 : vector<8x128xf32> to vector<1x8x128xf32>
    tpu.vector_store %arg4[%c0_43, %c0_44, %c0_45], %85 {strides = array<i32>} : memref<1x8x128xf32, #tpu.memory_space<vmem>>, vector<1x8x128xf32>,
    %86 = vector.shape_cast %71 : vector<256x128xf32> to vector<1x16x16x128xf32>
    %87 = arith.truncf %86 : vector<1x16x16x128xf32> to vector<1x16x16x128xbf16>
    %c0_46 = arith.constant 0 : index
    %c0_47 = arith.constant 0 : index
    %c0_48 = arith.constant 0 : index
    %c0_49 = arith.constant 0 : index
    %88 = vector.load %arg3[%c0_46, %c0_47, %c0_48, %c0_49] : memref<1x16x16x128xbf16, #tpu.memory_space<vmem>>, vector<1x16x16x128xbf16>
    tpu.vector_store %arg3[%c0_46, %c0_47, %c0_48, %c0_49], %87 {strides = array<i32>} : memref<1x16x16x128xbf16, #tpu.memory_space<vmem>>, vector<1x16x16x128xbf16>,
    return
  }
  func.func @transform_0(%arg0: i32) -> (i32, i32, i32, i32) {
    %c0_i32 = arith.constant 0 : i32
    %c0_i32_0 = arith.constant 0 : i32
    %c0_i32_1 = arith.constant 0 : i32
    %c0_i32_2 = arith.constant 0 : i32
    return %arg0, %c0_i32, %c0_i32_0, %c0_i32_1 : i32, i32, i32, i32
  }
  func.func @transform_1(%arg0: i32) -> (i32, i32, i32) {
    %c0_i32 = arith.constant 0 : i32
    %c0_i32_0 = arith.constant 0 : i32
    %c0_i32_1 = arith.constant 0 : i32
    %c0_i32_2 = arith.constant 0 : i32
    return %c0_i32, %c0_i32_0, %c0_i32_1 : i32, i32, i32
  }
  func.func @transform_2(%arg0: i32) -> (i32, i32, i32, i32) {
    %c0_i32 = arith.constant 0 : i32
    %c0_i32_0 = arith.constant 0 : i32
    %c0_i32_1 = arith.constant 0 : i32
    %c0_i32_2 = arith.constant 0 : i32
    return %arg0, %c0_i32, %c0_i32_0, %c0_i32_1 : i32, i32, i32, i32
  }
  func.func @transform_3(%arg0: i32) -> (i32, i32, i32) {
    %c0_i32 = arith.constant 0 : i32
    %c0_i32_0 = arith.constant 0 : i32
    %c0_i32_1 = arith.constant 0 : i32
    return %arg0, %c0_i32, %c0_i32_0 : i32, i32, i32
  }
}

</mosaic_0001>

<llo_original>
// kernel: tpu_custom_call.1
$region0: #{tpu_custom_call.1}
  #allocation0 [shape = 'u32[]', space=smem, size = 0x4, offset = 0x4, fixed_abs, tag = 'smem constant byte address 0x4 - core index']
  #allocation1 [shape = 'u32[72,128]{1,0:T(1,128)}', space=vmem, size = 0x9000, scoped, tag = 'internal scratch']
  %s0 = inlined_call_operand.hbm [shape: bf16[2,16,16,128], index: 0, kind: input, shape index: {}]
  %s1 = inlined_call_operand.hbm [shape: bf16[9,128,128], index: 1, kind: input, shape index: {}]
  %s2 = inlined_call_operand.hbm [shape: bf16[2,16,16,128], index: 2, kind: output, shape index: {0}]
  %s3 = inlined_call_operand.hbm [shape: f32[2,8,128], index: 3, kind: output, shape index: {1}]
  %4 = xla_tuple %s2, %s3
  %s5 = sld [smem:[#allocation0]]
  $region57: #{tpu_custom_call.1} parent=0
    _
  %s7 = ssub.s32 1, %s5
  %s8 = scalar_select 0, %s7, %s5
  $region1: #{tpu_custom_call.1} parent=0
    #allocation2 [shape = 'u8[131072]{0}', space=vmem, size = 0x20000, scoped, tag = 'input window, operand 0']
    #allocation3 [shape = 's32[2]{0}', space=sflag, size = 0x8, scoped, tag = 'scoped memory for tpu_custom_call.1']
    #allocation4 [shape = 's32[2]{0}', space=sflag, size = 0x8, scoped, tag = 'scoped memory for tpu_custom_call.1']
    #allocation5 [shape = 'u8[294912]{0}', space=vmem, size = 0x48000, scoped, tag = 'input window, operand 1, single buffered']
    #allocation6 [shape = 's32[1]{0}', space=sflag, size = 0x4, scoped, tag = 'scoped memory for tpu_custom_call.1']
    #allocation7 [shape = 'u8[131072]{0}', space=vmem, size = 0x20000, scoped, tag = 'output window, operand 0']
    #allocation8 [shape = 'u8[8192]{0}', space=vmem, size = 0x2000, scoped, tag = 'output window, operand 1']
    #allocation9 [shape = 's32[2]{0}', space=sflag, size = 0x8, scoped, tag = 'scoped memory for tpu_custom_call.1']
    %9 = vsyncpa [#allocation3], 0
    %s10 = scalar_lea.sflag [#allocation3], 1
    %11 = vsyncpa %s10, 0
    %12 = vsyncpa [#allocation6], 0
    %13 = vsyncpa [#allocation4], 0
    %s14 = scalar_lea.sflag [#allocation4], 1
    %15 = vsyncpa %s14, 0
    %16 = vsyncpa [#allocation9], 0
    %s17 = scalar_lea.sflag [#allocation9], 1
    %18 = vsyncpa %s17, 0
    loop: start=0, step=1, limit=4
    $region2: #{tpu_custom_call.1} parent=1 // loop_pre_header
      _
    $region3: #{tpu_custom_call.1} parent=1 // loop_header
      %s20 = sphi 0, %s24
      %p21 = scmp.ge.s32.totalorder %s20, 4
      %s30 = sphi 0, %s32
      %s33 = sphi 0, %s30
      %s34 = sphi 0, %s33
      %s50 = sphi 0, %s34
      %s54 = sphi 0, %s54
      %s56 = sphi 0, %s54
      %s57 = sphi 0, %s56
      %s71 = sphi 0, %s57
      %s77 = sphi 0, %s79
      %s80 = sphi 0, %s77
      %s81 = sphi 0, %s80
      %s97 = sphi 0, %s81
      %s103 = sphi 0, %s105
      %s106 = sphi 0, %s103
      %s107 = sphi 0, %s106
      %s123 = sphi 0, %s107
    $region4: #{tpu_custom_call.1} parent=1 // loop_header_branch
      %23 = sbr.rel (%p21) target = $region8
    $region5: #{tpu_custom_call.1} parent=1 // loop_body
      %s25 = ssub.s32 %s20, 1
      %s26 = ssub.s32 %s20, 2
      %s27 = sadd.s32 %s20, 1
      %s28 = ssub.s32 %s20, %s27
      %p29 = scmp.eq.s32.totalorder %s28, 0
      %s31 = sadd.s32 %s30, 1
      %s32 = scalar_select %p29, %s30, %s31
      %p35 = pneg %p29
      %p36 = scmp.eq.s32.totalorder %s20, 1
      %p37 = por %p35, %p36
      %p38 = scmp.ne.s32.totalorder %s30, %s33
      %p39 = scmp.eq.s32.totalorder %s20, 0
      %p40 = por %p38, %p39
      %p41 = scmp.ne.s32.totalorder %s30, %s33
      %p42 = scmp.eq.s32.totalorder %s25, 1
      %p43 = por %p41, %p42
      %p44 = scmp.ne.s32.totalorder %s33, %s34
      %p45 = scmp.eq.s32.totalorder %s25, 0
      %p46 = por %p44, %p45
      %p47 = scmp.ne.s32.totalorder %s33, %s34
      %p48 = scmp.eq.s32.totalorder %s26, 1
      %p49 = por %p47, %p48
      %p51 = scmp.ne.s32.totalorder %s34, %s50
      %p52 = scmp.eq.s32.totalorder %s26, 0
      %p53 = por %p51, %p52
      %s55 = sadd.s32 %s54, 1
      %p58 = scmp.eq.s32.totalorder %s20, 1
      %p59 = scmp.ne.s32.totalorder %s54, %s56
      %p60 = scmp.eq.s32.totalorder %s20, 0
      %p61 = por %p59, %p60
      %p62 = scmp.ne.s32.totalorder %s54, %s56
      %p63 = scmp.eq.s32.totalorder %s25, 1
      %p64 = por %p62, %p63
      %p65 = scmp.ne.s32.totalorder %s56, %s57
      %p66 = scmp.eq.s32.totalorder %s25, 0
      %p67 = por %p65, %p66
      %p68 = scmp.ne.s32.totalorder %s56, %s57
      %p69 = scmp.eq.s32.totalorder %s26, 1
      %p70 = por %p68, %p69
      %p72 = scmp.ne.s32.totalorder %s57, %s71
      %p73 = scmp.eq.s32.totalorder %s26, 0
      %p74 = por %p72, %p73
      %s75 = ssub.s32 %s20, %s27
      %p76 = scmp.eq.s32.totalorder %s75, 0
      %s78 = sadd.s32 %s77, 1
      %s79 = scalar_select %p76, %s77, %s78
      %p82 = pneg %p76
      %p83 = scmp.eq.s32.totalorder %s20, 1
      %p84 = por %p82, %p83
      %p85 = scmp.ne.s32.totalorder %s77, %s80
      %p86 = scmp.eq.s32.totalorder %s20, 0
      %p87 = por %p85, %p86
      %p88 = scmp.ne.s32.totalorder %s77, %s80
      %p89 = scmp.eq.s32.totalorder %s25, 1
      %p90 = por %p88, %p89
      %p91 = scmp.ne.s32.totalorder %s80, %s81
      %p92 = scmp.eq.s32.totalorder %s25, 0
      %p93 = por %p91, %p92
      %p94 = scmp.ne.s32.totalorder %s80, %s81
      %p95 = scmp.eq.s32.totalorder %s26, 1
      %p96 = por %p94, %p95
      %p98 = scmp.ne.s32.totalorder %s81, %s97
      %p99 = scmp.eq.s32.totalorder %s26, 0
      %p100 = por %p98, %p99
      %s101 = ssub.s32 %s20, %s27
      %p102 = scmp.eq.s32.totalorder %s101, 0
      %s104 = sadd.s32 %s103, 1
      %s105 = scalar_select %p102, %s103, %s104
      %p108 = pneg %p102
      %p109 = scmp.eq.s32.totalorder %s20, 1
      %p110 = por %p108, %p109
      %p111 = scmp.ne.s32.totalorder %s103, %s106
      %p112 = scmp.eq.s32.totalorder %s20, 0
      %p113 = por %p111, %p112
      %p114 = scmp.ne.s32.totalorder %s103, %s106
      %p115 = scmp.eq.s32.totalorder %s25, 1
      %p116 = por %p114, %p115
      %p117 = scmp.ne.s32.totalorder %s106, %s107
      %p118 = scmp.eq.s32.totalorder %s25, 0
      %p119 = por %p117, %p118
      %p120 = scmp.ne.s32.totalorder %s106, %s107
      %p121 = scmp.eq.s32.totalorder %s26, 1
      %p122 = por %p120, %p121
      %p124 = scmp.ne.s32.totalorder %s107, %s123
      %p125 = scmp.eq.s32.totalorder %s26, 0
      %p126 = por %p124, %p125
      %p127 = scmp.le.s32.totalorder 1, %s20
      %p128 = scmp.lt.s32.totalorder %s20, 3
      %p129 = pnand %p127, %p128
      %p130 = pneg %p129
      // Predicated region
      $region9: #{tpu_custom_call.1} parent=5 // pred_check
        _
      $region10: #{tpu_custom_call.1} parent=5 // pred_check_branch
        %132 = sbr.rel (%p129) target = $region12
      $region11: #{tpu_custom_call.1} parent=5 // pred_region
        %s133 = ssub.s32 %s20, 1
        // Predicated region
        $region13: #{tpu_custom_call.1} parent=11 // pred_check
          %p134 = pneg %p67
        $region14: #{tpu_custom_call.1} parent=11 // pred_check_branch
          %136 = sbr.rel (%p134) target = $region16
        $region15: #{tpu_custom_call.1} parent=11 // pred_region
          %138 = vsyncadd [#allocation6], 0
          %s139 = sshll.u32 %s1, 4
          %s140 = int_to_ptr.hbm [resolvable:$true] %s139
          %s141 = sshll.u32 [#allocation5], 4
          %s142 = int_to_ptr.vmem [resolvable:$true] %s141
          %147 = dma.hbm_to_vmem [thread:$0]  %s140, 9216, %s142, [#allocation6], 64, 64, 4
        $region16: #{tpu_custom_call.1} parent=11 // pred_fallthru
          _
      $region12: #{tpu_custom_call.1} parent=5 // pred_fallthru
        _
      %p148 = scmp.lt.s32.totalorder %s20, 2
      // Predicated region
      $region17: #{tpu_custom_call.1} parent=5 // pred_check
        %p149 = pneg %p148
      $region18: #{tpu_custom_call.1} parent=5 // pred_check_branch
        %151 = sbr.rel (%p149) target = $region20
      $region19: #{tpu_custom_call.1} parent=5 // pred_region
        // Predicated region
        $region21: #{tpu_custom_call.1} parent=19 // pred_check
          %p152 = pneg %p40
        $region22: #{tpu_custom_call.1} parent=19 // pred_check_branch
          %154 = sbr.rel (%p152) target = $region24
        $region23: #{tpu_custom_call.1} parent=19 // pred_region
          %s155 = sand.u32 %s30, 1
          %s156 = scalar_lea.sflag [#allocation3], %s155
          %s157 = sand.u32 %s30, 1
          %s158 = smul.addr %s157, 128
          %s159 = scalar_lea.vmem [#allocation2], %s158
          %161 = vsyncadd %s156, 0
          %s162 = smul.addr %s20, 32
          %s163 = smul.addr %s162, 4
          %s164 = scalar_lea.hbm %s0, %s163
          %s165 = sshll.u32 %s164, 4
          %s166 = int_to_ptr.hbm [resolvable:$true] %s165
          %s167 = sshll.u32 %s159, 4
          %s168 = int_to_ptr.vmem [resolvable:$true] %s167
          %173 = dma.hbm_to_vmem [thread:$0]  %s166, 2048, %s168, %s156, 64, 64, 4
        $region24: #{tpu_custom_call.1} parent=19 // pred_fallthru
          _
      $region20: #{tpu_custom_call.1} parent=5 // pred_fallthru
        _
      %p174 = scmp.le.s32.totalorder 1, %s20
      %p175 = scmp.lt.s32.totalorder %s20, 3
      %p176 = pnand %p174, %p175
      %p177 = pneg %p176
      // Predicated region
      $region25: #{tpu_custom_call.1} parent=5 // pred_check
        _
      $region26: #{tpu_custom_call.1} parent=5 // pred_check_branch
        %179 = sbr.rel (%p176) target = $region28
      $region27: #{tpu_custom_call.1} parent=5 // pred_region
        %s180 = ssub.s32 %s20, 1
        %s181 = sand.u32 %s33, 1
        %s182 = scalar_lea.sflag [#allocation3], %s181
        %s183 = sand.u32 %s33, 1
        %s184 = smul.addr %s183, 128
        %s185 = scalar_lea.vmem [#allocation2], %s184
        // Predicated region
        $region29: #{tpu_custom_call.1} parent=27 // pred_check
          %p186 = pneg %p46
        $region30: #{tpu_custom_call.1} parent=27 // pred_check_branch
          %188 = sbr.rel (%p186) target = $region32
        $region31: #{tpu_custom_call.1} parent=27 // pred_region
          %190 = dma.done %s182, 2048
        $region32: #{tpu_custom_call.1} parent=27 // pred_fallthru
          _
        // Predicated region
        $region33: #{tpu_custom_call.1} parent=27 // pred_check
          %p191 = pneg %p67
        $region34: #{tpu_custom_call.1} parent=27 // pred_check_branch
          %193 = sbr.rel (%p191) target = $region36
        $region35: #{tpu_custom_call.1} parent=27 // pred_region
          %195 = dma.done [#allocation6], 9216
        $region36: #{tpu_custom_call.1} parent=27 // pred_fallthru
          _
        %s196 = sand.u32 %s33, 1
        %s197 = scalar_lea.sflag [#allocation3], %s196
        %s198 = sand.u32 %s33, 1
        %s199 = smul.addr %s198, 128
        %s200 = scalar_lea.vmem [#allocation2], %s199
        %p201 = pneg %p46
        %p202 = pneg %p43
        %p203 = pneg %p67
        %p204 = pneg %p64
        %p205 = pneg %p93
        %p206 = pneg %p90
        %s207 = sand.u32 %s80, 1
        %s208 = scalar_lea.sflag [#allocation4], %s207
        %s209 = sand.u32 %s80, 1
        %s210 = smul.addr %s209, 128
        %s211 = scalar_lea.vmem [#allocation7], %s210
        %p212 = pneg %p119
        %p213 = pneg %p116
        %s214 = sand.u32 %s106, 1
        %s215 = scalar_lea.sflag [#allocation9], %s214
        %s216 = sand.u32 %s106, 1
        %s217 = smul.addr %s216, 8
        %s218 = scalar_lea.vmem [#allocation8], %s217
        %v220 = vld [vmem:[%s185] sm:$0xf]
        %v221 = vld [vmem:[%s185 + $0x4] sm:$0xf]
        %v222 = vld [vmem:[%s185 + $0x8] sm:$0xf]
        %v223 = vld [vmem:[%s185 + $0xc] sm:$0xf]
        %v224 = vld [vmem:[%s185 + $0x10] sm:$0xf]
        %v225 = vld [vmem:[%s185 + $0x14] sm:$0xf]
        %v226 = vld [vmem:[%s185 + $0x18] sm:$0xf]
        %v227 = vld [vmem:[%s185 + $0x1c] sm:$0xf]
        %v228 = vld [vmem:[%s185 + $0x20] sm:$0xf]
        %v229 = vld [vmem:[%s185 + $0x24] sm:$0xf]
        %v230 = vld [vmem:[%s185 + $0x28] sm:$0xf]
        %v231 = vld [vmem:[%s185 + $0x2c] sm:$0xf]
        %v232 = vld [vmem:[%s185 + $0x30] sm:$0xf]
        %v233 = vld [vmem:[%s185 + $0x34] sm:$0xf]
        %v234 = vld [vmem:[%s185 + $0x38] sm:$0xf]
        %v235 = vld [vmem:[%s185 + $0x3c] sm:$0xf]
        %v236 = vld [vmem:[%s185 + $0x40] sm:$0xf]
        %v237 = vld [vmem:[%s185 + $0x44] sm:$0xf]
        %v238 = vld [vmem:[%s185 + $0x48] sm:$0xf]
        %v239 = vld [vmem:[%s185 + $0x4c] sm:$0xf]
        %v240 = vld [vmem:[%s185 + $0x50] sm:$0xf]
        %v241 = vld [vmem:[%s185 + $0x54] sm:$0xf]
        %v242 = vld [vmem:[%s185 + $0x58] sm:$0xf]
        %v243 = vld [vmem:[%s185 + $0x5c] sm:$0xf]
        %v244 = vld [vmem:[%s185 + $0x60] sm:$0xf]
        %v245 = vld [vmem:[%s185 + $0x64] sm:$0xf]
        %v246 = vld [vmem:[%s185 + $0x68] sm:$0xf]
        %v247 = vld [vmem:[%s185 + $0x6c] sm:$0xf]
        %v248 = vld [vmem:[%s185 + $0x70] sm:$0xf]
        %v249 = vld [vmem:[%s185 + $0x74] sm:$0xf]
        %v250 = vld [vmem:[%s185 + $0x78] sm:$0xf]
        %v251 = vld [vmem:[%s185 + $0x7c] sm:$0xf]
        %v284 = vunpack.c.l.b16 %v220
        %v285 = vunpack.c.l.b16 %v221
        %v286 = vunpack.c.l.b16 %v222
        %v287 = vunpack.c.l.b16 %v223
        %v288 = vunpack.c.l.b16 %v224
        %v289 = vunpack.c.l.b16 %v225
        %v290 = vunpack.c.l.b16 %v226
        %v291 = vunpack.c.l.b16 %v227
        %v292 = vunpack.c.l.b16 %v228
        %v293 = vunpack.c.l.b16 %v229
        %v294 = vunpack.c.l.b16 %v230
        %v295 = vunpack.c.l.b16 %v231
        %v296 = vunpack.c.l.b16 %v232
        %v297 = vunpack.c.l.b16 %v233
        %v298 = vunpack.c.l.b16 %v234
        %v299 = vunpack.c.l.b16 %v235
        %v300 = vunpack.c.l.b16 %v236
        %v301 = vunpack.c.l.b16 %v237
        %v302 = vunpack.c.l.b16 %v238
        %v303 = vunpack.c.l.b16 %v239
        %v304 = vunpack.c.l.b16 %v240
        %v305 = vunpack.c.l.b16 %v241
        %v306 = vunpack.c.l.b16 %v242
        %v307 = vunpack.c.l.b16 %v243
        %v308 = vunpack.c.l.b16 %v244
        %v309 = vunpack.c.l.b16 %v245
        %v310 = vunpack.c.l.b16 %v246
        %v311 = vunpack.c.l.b16 %v247
        %v312 = vunpack.c.l.b16 %v248
        %v313 = vunpack.c.l.b16 %v249
        %v314 = vunpack.c.l.b16 %v250
        %v315 = vunpack.c.l.b16 %v251
        %v316 = vpack.c.b16 %v285, %v284
        %v317 = vpack.c.b16 %v287, %v286
        %v318 = vpack.c.b16 %v289, %v288
        %v319 = vpack.c.b16 %v291, %v290
        %v320 = vpack.c.b16 %v293, %v292
        %v321 = vpack.c.b16 %v295, %v294
        %v322 = vpack.c.b16 %v297, %v296
        %v323 = vpack.c.b16 %v299, %v298
        %v324 = vpack.c.b16 %v301, %v300
        %v325 = vpack.c.b16 %v303, %v302
        %v326 = vpack.c.b16 %v305, %v304
        %v327 = vpack.c.b16 %v307, %v306
        %v328 = vpack.c.b16 %v309, %v308
        %v329 = vpack.c.b16 %v311, %v310
        %v330 = vpack.c.b16 %v313, %v312
        %v331 = vpack.c.b16 %v315, %v314
        %v333 = vshrl.u32 %v316, 16
        %v335 = vrot.slane %v333, 7
        %v336 = vshll.u32 %v316, 16
        %v338 = vor.u32 %v335, %v336
        %v340 = vshrl.u32 %v317, 16
        %v342 = vrot.slane %v340, 7
        %v343 = vshll.u32 %v317, 16
        %v345 = vor.u32 %v342, %v343
        %v347 = vshrl.u32 %v318, 16
        %v349 = vrot.slane %v347, 7
        %v350 = vshll.u32 %v318, 16
        %v352 = vor.u32 %v349, %v350
        %v354 = vshrl.u32 %v319, 16
        %v356 = vrot.slane %v354, 7
        %v357 = vshll.u32 %v319, 16
        %v359 = vor.u32 %v356, %v357
        %v361 = vshrl.u32 %v320, 16
        %v363 = vrot.slane %v361, 7
        %v364 = vshll.u32 %v320, 16
        %v366 = vor.u32 %v363, %v364
        %v368 = vshrl.u32 %v321, 16
        %v370 = vrot.slane %v368, 7
        %v371 = vshll.u32 %v321, 16
        %v373 = vor.u32 %v370, %v371
        %v375 = vshrl.u32 %v322, 16
        %v377 = vrot.slane %v375, 7
        %v378 = vshll.u32 %v322, 16
        %v380 = vor.u32 %v377, %v378
        %v382 = vshrl.u32 %v323, 16
        %v384 = vrot.slane %v382, 7
        %v385 = vshll.u32 %v323, 16
        %v387 = vor.u32 %v384, %v385
        %v389 = vshrl.u32 %v324, 16
        %v391 = vrot.slane %v389, 7
        %v392 = vshll.u32 %v324, 16
        %v394 = vor.u32 %v391, %v392
        %v396 = vshrl.u32 %v325, 16
        %v398 = vrot.slane %v396, 7
        %v399 = vshll.u32 %v325, 16
        %v401 = vor.u32 %v398, %v399
        %v403 = vshrl.u32 %v326, 16
        %v405 = vrot.slane %v403, 7
        %v406 = vshll.u32 %v326, 16
        %v408 = vor.u32 %v405, %v406
        %v410 = vshrl.u32 %v327, 16
        %v412 = vrot.slane %v410, 7
        %v413 = vshll.u32 %v327, 16
        %v415 = vor.u32 %v412, %v413
        %v417 = vshrl.u32 %v328, 16
        %v419 = vrot.slane %v417, 7
        %v420 = vshll.u32 %v328, 16
        %v422 = vor.u32 %v419, %v420
        %v424 = vshrl.u32 %v329, 16
        %v426 = vrot.slane %v424, 7
        %v427 = vshll.u32 %v329, 16
        %v429 = vor.u32 %v426, %v427
        %v431 = vshrl.u32 %v330, 16
        %v433 = vrot.slane %v431, 7
        %v434 = vshll.u32 %v330, 16
        %v436 = vor.u32 %v433, %v434
        %v438 = vshrl.u32 %v331, 16
        %v440 = vrot.slane %v438, 7
        %v441 = vshll.u32 %v331, 16
        %v443 = vor.u32 %v440, %v441
        %vm460 = vcmask 1040384
        %vm461 = vsmask.f32 256
        %vm462 = vmand %vm460, %vm461
        %v463 = vsel %vm462, 0, %v338
        %v464 = vsel %vm462, 0, %v345
        %v465 = vsel %vm462, 0, %v352
        %v466 = vsel %vm462, 0, %v359
        %v467 = vsel %vm462, 0, %v366
        %v468 = vsel %vm462, 0, %v373
        %v469 = vsel %vm462, 0, %v380
        %v470 = vsel %vm462, 0, %v387
        %v471 = vsel %vm462, 0, %v394
        %v472 = vsel %vm462, 0, %v401
        %v473 = vsel %vm462, 0, %v408
        %v474 = vsel %vm462, 0, %v415
        %v475 = vsel %vm462, 0, %v422
        %v476 = vsel %vm462, 0, %v429
        %v477 = vsel %vm462, 0, %v436
        %v478 = vsel %vm462, 0, %v443
        %v479 = vrot.slane %v336, 1
        %v480 = vor.u32 %v333, %v479
        %v481 = vrot.slane %v343, 1
        %v482 = vor.u32 %v340, %v481
        %v483 = vrot.slane %v350, 1
        %v484 = vor.u32 %v347, %v483
        %v485 = vrot.slane %v357, 1
        %v486 = vor.u32 %v354, %v485
        %v487 = vrot.slane %v364, 1
        %v488 = vor.u32 %v361, %v487
        %v489 = vrot.slane %v371, 1
        %v490 = vor.u32 %v368, %v489
        %v491 = vrot.slane %v378, 1
        %v492 = vor.u32 %v375, %v491
        %v493 = vrot.slane %v385, 1
        %v494 = vor.u32 %v382, %v493
        %v495 = vrot.slane %v392, 1
        %v496 = vor.u32 %v389, %v495
        %v497 = vrot.slane %v399, 1
        %v498 = vor.u32 %v396, %v497
        %v499 = vrot.slane %v406, 1
        %v500 = vor.u32 %v403, %v499
        %v501 = vrot.slane %v413, 1
        %v502 = vor.u32 %v410, %v501
        %v503 = vrot.slane %v420, 1
        %v504 = vor.u32 %v417, %v503
        %v505 = vrot.slane %v427, 1
        %v506 = vor.u32 %v424, %v505
        %v507 = vrot.slane %v434, 1
        %v508 = vor.u32 %v431, %v507
        %v509 = vrot.slane %v441, 1
        %v510 = vor.u32 %v438, %v509
        %vm527 = vcmask 1047552
        %vm528 = vsmask.f32 7424
        %vm529 = vmand %vm527, %vm528
        %v530 = vsel %vm529, %v480, 0
        %v531 = vsel %vm529, %v482, 0
        %v532 = vsel %vm529, %v484, 0
        %v533 = vsel %vm529, %v486, 0
        %v534 = vsel %vm529, %v488, 0
        %v535 = vsel %vm529, %v490, 0
        %v536 = vsel %vm529, %v492, 0
        %v537 = vsel %vm529, %v494, 0
        %v538 = vsel %vm529, %v496, 0
        %v539 = vsel %vm529, %v498, 0
        %v540 = vsel %vm529, %v500, 0
        %v541 = vsel %vm529, %v502, 0
        %v542 = vsel %vm529, %v504, 0
        %v543 = vsel %vm529, %v506, 0
        %v544 = vsel %vm529, %v508, 0
        %v545 = vsel %vm529, %v510, 0
        %v546 = vld [vmem:[#allocation5] sm:$0xf]
        %v547 = vld [vmem:[#allocation5 + $0x4] sm:$0xf]
        %v548 = vld [vmem:[#allocation5 + $0x8] sm:$0xf]
        %v549 = vld [vmem:[#allocation5 + $0xc] sm:$0xf]
        %v550 = vld [vmem:[#allocation5 + $0x10] sm:$0xf]
        %v551 = vld [vmem:[#allocation5 + $0x14] sm:$0xf]
        %v552 = vld [vmem:[#allocation5 + $0x18] sm:$0xf]
        %v553 = vld [vmem:[#allocation5 + $0x1c] sm:$0xf]
        %v554 = vld [vmem:[#allocation5 + $0x20] sm:$0xf]
        %v555 = vld [vmem:[#allocation5 + $0x24] sm:$0xf]
        %v556 = vld [vmem:[#allocation5 + $0x28] sm:$0xf]
        %v557 = vld [vmem:[#allocation5 + $0x2c] sm:$0xf]
        %v558 = vld [vmem:[#allocation5 + $0x30] sm:$0xf]
        %v559 = vld [vmem:[#allocation5 + $0x34] sm:$0xf]
        %v560 = vld [vmem:[#allocation5 + $0x38] sm:$0xf]
        %v561 = vld [vmem:[#allocation5 + $0x3c] sm:$0xf]
        %s577 = scalar_lea.vmem [#allocation5], 64
        %v578 = vld [vmem:[%s577] sm:$0xf]
        %v579 = vld [vmem:[%s577 + $0x4] sm:$0xf]
        %v580 = vld [vmem:[%s577 + $0x8] sm:$0xf]
        %v581 = vld [vmem:[%s577 + $0xc] sm:$0xf]
        %v582 = vld [vmem:[%s577 + $0x10] sm:$0xf]
        %v583 = vld [vmem:[%s577 + $0x14] sm:$0xf]
        %v584 = vld [vmem:[%s577 + $0x18] sm:$0xf]
        %v585 = vld [vmem:[%s577 + $0x1c] sm:$0xf]
        %v586 = vld [vmem:[%s577 + $0x20] sm:$0xf]
        %v587 = vld [vmem:[%s577 + $0x24] sm:$0xf]
        %v588 = vld [vmem:[%s577 + $0x28] sm:$0xf]
        %v589 = vld [vmem:[%s577 + $0x2c] sm:$0xf]
        %v590 = vld [vmem:[%s577 + $0x30] sm:$0xf]
        %v591 = vld [vmem:[%s577 + $0x34] sm:$0xf]
        %v592 = vld [vmem:[%s577 + $0x38] sm:$0xf]
        %v593 = vld [vmem:[%s577 + $0x3c] sm:$0xf]
        %v610 = vunpack.c.l.b16 %v578
        %v611 = vunpack.c.l.b16 %v579
        %v612 = vunpack.c.l.b16 %v580
        %v613 = vunpack.c.l.b16 %v581
        %v614 = vunpack.c.l.b16 %v582
        %v615 = vunpack.c.l.b16 %v583
        %v616 = vunpack.c.l.b16 %v584
        %v617 = vunpack.c.l.b16 %v585
        %v618 = vunpack.c.l.b16 %v586
        %v619 = vunpack.c.l.b16 %v587
        %v620 = vunpack.c.l.b16 %v588
        %v621 = vunpack.c.l.b16 %v589
        %v622 = vunpack.c.l.b16 %v590
        %v623 = vunpack.c.l.b16 %v591
        %v624 = vunpack.c.l.b16 %v592
        %v625 = vunpack.c.l.b16 %v593
        %v626 = vpack.c.b16 %v611, %v610
        %v627 = vpack.c.b16 %v613, %v612
        %v628 = vpack.c.b16 %v615, %v614
        %v629 = vpack.c.b16 %v617, %v616
        %v630 = vpack.c.b16 %v619, %v618
        %v631 = vpack.c.b16 %v621, %v620
        %v632 = vpack.c.b16 %v623, %v622
        %v633 = vpack.c.b16 %v625, %v624
        %642 = vmatpush.bf16.msra.mxu0 %v633
        %643 = vmatpush.bf16.msra.mxu0 %v632
        %644 = vmatpush.bf16.msra.mxu0 %v631
        %645 = vmatpush.bf16.msra.mxu0 %v630
        %646 = vmatpush.bf16.msra.mxu0 %v629
        %647 = vmatpush.bf16.msra.mxu0 %v628
        %648 = vmatpush.bf16.msra.mxu0 %v627
        %649 = vmatpush.bf16.msra.mxu0 %v626
        %650 = vmatmul.bf16.gmra.mxu0 0
        %v651 = vpop.f32.mrf.mxu0
        %v652 = vadd.f32 0.0, %v651
        %v653 = vpop.f32.mrf.mxu0
        %v654 = vadd.f32 0.0, %v653
        %655 = vmatmul.bf16.gmra.mxu0 %v316
        %v656 = vpop.f32.mrf.mxu0
        %v657 = vadd.f32 0.0, %v656
        %v658 = vpop.f32.mrf.mxu0
        %v659 = vadd.f32 0.0, %v658
        %660 = vmatmul.bf16.gmra.mxu0 %v317
        %v661 = vpop.f32.mrf.mxu0
        %v662 = vadd.f32 0.0, %v661
        %v663 = vpop.f32.mrf.mxu0
        %v664 = vadd.f32 0.0, %v663
        %665 = vmatmul.bf16.gmra.mxu0 %v318
        %v666 = vpop.f32.mrf.mxu0
        %v667 = vadd.f32 0.0, %v666
        %v668 = vpop.f32.mrf.mxu0
        %v669 = vadd.f32 0.0, %v668
        %670 = vmatmul.bf16.gmra.mxu0 %v319
        %v671 = vpop.f32.mrf.mxu0
        %v672 = vadd.f32 0.0, %v671
        %v673 = vpop.f32.mrf.mxu0
        %v674 = vadd.f32 0.0, %v673
        %675 = vmatmul.bf16.gmra.mxu0 %v320
        %v676 = vpop.f32.mrf.mxu0
        %v677 = vadd.f32 0.0, %v676
        %v678 = vpop.f32.mrf.mxu0
        %v679 = vadd.f32 0.0, %v678
        %680 = vmatmul.bf16.gmra.mxu0 %v321
        %v681 = vpop.f32.mrf.mxu0
        %v682 = vadd.f32 0.0, %v681
        %v683 = vpop.f32.mrf.mxu0
        %v684 = vadd.f32 0.0, %v683
        %685 = vmatmul.bf16.gmra.mxu0 %v322
        %v686 = vpop.f32.mrf.mxu0
        %v687 = vadd.f32 0.0, %v686
        %v688 = vpop.f32.mrf.mxu0
        %v689 = vadd.f32 0.0, %v688
        %690 = vmatmul.bf16.gmra.mxu0 %v323
        %v691 = vpop.f32.mrf.mxu0
        %v692 = vadd.f32 0.0, %v691
        %v693 = vpop.f32.mrf.mxu0
        %v694 = vadd.f32 0.0, %v693
        %695 = vmatmul.bf16.gmra.mxu0 %v324
        %v696 = vpop.f32.mrf.mxu0
        %v697 = vadd.f32 0.0, %v696
        %v698 = vpop.f32.mrf.mxu0
        %v699 = vadd.f32 0.0, %v698
        %700 = vmatmul.bf16.gmra.mxu0 %v325
        %v701 = vpop.f32.mrf.mxu0
        %v702 = vadd.f32 0.0, %v701
        %v703 = vpop.f32.mrf.mxu0
        %v704 = vadd.f32 0.0, %v703
        %705 = vmatmul.bf16.gmra.mxu0 %v326
        %v706 = vpop.f32.mrf.mxu0
        %v707 = vadd.f32 0.0, %v706
        %v708 = vpop.f32.mrf.mxu0
        %v709 = vadd.f32 0.0, %v708
        %710 = vmatmul.bf16.gmra.mxu0 %v327
        %v711 = vpop.f32.mrf.mxu0
        %v712 = vadd.f32 0.0, %v711
        %v713 = vpop.f32.mrf.mxu0
        %v714 = vadd.f32 0.0, %v713
        %715 = vmatmul.bf16.gmra.mxu0 %v328
        %v716 = vpop.f32.mrf.mxu0
        %v717 = vadd.f32 0.0, %v716
        %v718 = vpop.f32.mrf.mxu0
        %v719 = vadd.f32 0.0, %v718
        %720 = vmatmul.bf16.gmra.mxu0 %v329
        %v721 = vpop.f32.mrf.mxu0
        %v722 = vadd.f32 0.0, %v721
        %v723 = vpop.f32.mrf.mxu0
        %v724 = vadd.f32 0.0, %v723
        %725 = vmatmul.bf16.gmra.mxu0 %v330
        %v726 = vpop.f32.mrf.mxu0
        %v727 = vadd.f32 0.0, %v726
        %v728 = vpop.f32.mrf.mxu0
        %v729 = vadd.f32 0.0, %v728
        %730 = vdwg.mxu0
        %v747 = vunpack.c.l.b16 %v546
        %v748 = vunpack.c.l.b16 %v547
        %v749 = vunpack.c.l.b16 %v548
        %v750 = vunpack.c.l.b16 %v549
        %v751 = vunpack.c.l.b16 %v550
        %v752 = vunpack.c.l.b16 %v551
        %v753 = vunpack.c.l.b16 %v552
        %v754 = vunpack.c.l.b16 %v553
        %v755 = vunpack.c.l.b16 %v554
        %v756 = vunpack.c.l.b16 %v555
        %v757 = vunpack.c.l.b16 %v556
        %v758 = vunpack.c.l.b16 %v557
        %v759 = vunpack.c.l.b16 %v558
        %v760 = vunpack.c.l.b16 %v559
        %v761 = vunpack.c.l.b16 %v560
        %v762 = vunpack.c.l.b16 %v561
        %v763 = vpack.c.b16 %v748, %v747
        %v764 = vpack.c.b16 %v750, %v749
        %v765 = vpack.c.b16 %v752, %v751
        %v766 = vpack.c.b16 %v754, %v753
        %v767 = vpack.c.b16 %v756, %v755
        %v768 = vpack.c.b16 %v758, %v757
        %v769 = vpack.c.b16 %v760, %v759
        %v770 = vpack.c.b16 %v762, %v761
        %779 = vmatpush.bf16.msra.mxu0 %v770
        %780 = vmatpush.bf16.msra.mxu0 %v769
        %781 = vmatpush.bf16.msra.mxu0 %v768
        %782 = vmatpush.bf16.msra.mxu0 %v767
        %783 = vmatpush.bf16.msra.mxu0 %v766
        %784 = vmatpush.bf16.msra.mxu0 %v765
        %785 = vmatpush.bf16.msra.mxu0 %v764
        %786 = vmatpush.bf16.msra.mxu0 %v763
        %787 = vmatmul.bf16.gmra.mxu0 0
        %v788 = vpop.f32.mrf.mxu0
        %v789 = vadd.f32 %v652, %v788
        %v790 = vpop.f32.mrf.mxu0
        %v791 = vadd.f32 %v654, %v790
        %792 = vmatmul.bf16.gmra.mxu0 %v463
        %v793 = vpop.f32.mrf.mxu0
        %v794 = vadd.f32 %v657, %v793
        %v795 = vpop.f32.mrf.mxu0
        %v796 = vadd.f32 %v659, %v795
        %797 = vmatmul.bf16.gmra.mxu0 %v464
        %v798 = vpop.f32.mrf.mxu0
        %v799 = vadd.f32 %v662, %v798
        %v800 = vpop.f32.mrf.mxu0
        %v801 = vadd.f32 %v664, %v800
        %802 = vmatmul.bf16.gmra.mxu0 %v465
        %v803 = vpop.f32.mrf.mxu0
        %v804 = vadd.f32 %v667, %v803
        %v805 = vpop.f32.mrf.mxu0
        %v806 = vadd.f32 %v669, %v805
        %807 = vmatmul.bf16.gmra.mxu0 %v466
        %v808 = vpop.f32.mrf.mxu0
        %v809 = vadd.f32 %v672, %v808
        %v810 = vpop.f32.mrf.mxu0
        %v811 = vadd.f32 %v674, %v810
        %812 = vmatmul.bf16.gmra.mxu0 %v467
        %v813 = vpop.f32.mrf.mxu0
        %v814 = vadd.f32 %v677, %v813
        %v815 = vpop.f32.mrf.mxu0
        %v816 = vadd.f32 %v679, %v815
        %817 = vmatmul.bf16.gmra.mxu0 %v468
        %v818 = vpop.f32.mrf.mxu0
        %v819 = vadd.f32 %v682, %v818
        %v820 = vpop.f32.mrf.mxu0
        %v821 = vadd.f32 %v684, %v820
        %822 = vmatmul.bf16.gmra.mxu0 %v469
        %v823 = vpop.f32.mrf.mxu0
        %v824 = vadd.f32 %v687, %v823
        %v825 = vpop.f32.mrf.mxu0
        %v826 = vadd.f32 %v689, %v825
        %827 = vmatmul.bf16.gmra.mxu0 %v470
        %v828 = vpop.f32.mrf.mxu0
        %v829 = vadd.f32 %v692, %v828
        %v830 = vpop.f32.mrf.mxu0
        %v831 = vadd.f32 %v694, %v830
        %832 = vmatmul.bf16.gmra.mxu0 %v471
        %v833 = vpop.f32.mrf.mxu0
        %v834 = vadd.f32 %v697, %v833
        %v835 = vpop.f32.mrf.mxu0
        %v836 = vadd.f32 %v699, %v835
        %837 = vmatmul.bf16.gmra.mxu0 %v472
        %v838 = vpop.f32.mrf.mxu0
        %v839 = vadd.f32 %v702, %v838
        %v840 = vpop.f32.mrf.mxu0
        %v841 = vadd.f32 %v704, %v840
        %842 = vmatmul.bf16.gmra.mxu0 %v473
        %v843 = vpop.f32.mrf.mxu0
        %v844 = vadd.f32 %v707, %v843
        %v845 = vpop.f32.mrf.mxu0
        %v846 = vadd.f32 %v709, %v845
        %847 = vmatmul.bf16.gmra.mxu0 %v474
        %v848 = vpop.f32.mrf.mxu0
        %v849 = vadd.f32 %v712, %v848
        %v850 = vpop.f32.mrf.mxu0
        %v851 = vadd.f32 %v714, %v850
        %852 = vmatmul.bf16.gmra.mxu0 %v475
        %v853 = vpop.f32.mrf.mxu0
        %v854 = vadd.f32 %v717, %v853
        %v855 = vpop.f32.mrf.mxu0
        %v856 = vadd.f32 %v719, %v855
        %857 = vmatmul.bf16.gmra.mxu0 %v476
        %v858 = vpop.f32.mrf.mxu0
        %v859 = vadd.f32 %v722, %v858
        %v860 = vpop.f32.mrf.mxu0
        %v861 = vadd.f32 %v724, %v860
        %862 = vmatmul.bf16.gmra.mxu0 %v477
        %v863 = vpop.f32.mrf.mxu0
        %v864 = vadd.f32 %v727, %v863
        %v865 = vpop.f32.mrf.mxu0
        %v866 = vadd.f32 %v729, %v865
        %867 = vdwg.mxu0
        %s868 = scalar_lea.vmem [#allocation5], 128
        %v869 = vld [vmem:[%s868] sm:$0xf]
        %v870 = vld [vmem:[%s868 + $0x4] sm:$0xf]
        %v871 = vld [vmem:[%s868 + $0x8] sm:$0xf]
        %v872 = vld [vmem:[%s868 + $0xc] sm:$0xf]
        %v873 = vld [vmem:[%s868 + $0x10] sm:$0xf]
        %v874 = vld [vmem:[%s868 + $0x14] sm:$0xf]
        %v875 = vld [vmem:[%s868 + $0x18] sm:$0xf]
        %v876 = vld [vmem:[%s868 + $0x1c] sm:$0xf]
        %v877 = vld [vmem:[%s868 + $0x20] sm:$0xf]
        %v878 = vld [vmem:[%s868 + $0x24] sm:$0xf]
        %v879 = vld [vmem:[%s868 + $0x28] sm:$0xf]
        %v880 = vld [vmem:[%s868 + $0x2c] sm:$0xf]
        %v881 = vld [vmem:[%s868 + $0x30] sm:$0xf]
        %v882 = vld [vmem:[%s868 + $0x34] sm:$0xf]
        %v883 = vld [vmem:[%s868 + $0x38] sm:$0xf]
        %v884 = vld [vmem:[%s868 + $0x3c] sm:$0xf]
        %v901 = vunpack.c.l.b16 %v869
        %v902 = vunpack.c.l.b16 %v870
        %v903 = vunpack.c.l.b16 %v871
        %v904 = vunpack.c.l.b16 %v872
        %v905 = vunpack.c.l.b16 %v873
        %v906 = vunpack.c.l.b16 %v874
        %v907 = vunpack.c.l.b16 %v875
        %v908 = vunpack.c.l.b16 %v876
        %v909 = vunpack.c.l.b16 %v877
        %v910 = vunpack.c.l.b16 %v878
        %v911 = vunpack.c.l.b16 %v879
        %v912 = vunpack.c.l.b16 %v880
        %v913 = vunpack.c.l.b16 %v881
        %v914 = vunpack.c.l.b16 %v882
        %v915 = vunpack.c.l.b16 %v883
        %v916 = vunpack.c.l.b16 %v884
        %v917 = vpack.c.b16 %v902, %v901
        %v918 = vpack.c.b16 %v904, %v903
        %v919 = vpack.c.b16 %v906, %v905
        %v920 = vpack.c.b16 %v908, %v907
        %v921 = vpack.c.b16 %v910, %v909
        %v922 = vpack.c.b16 %v912, %v911
        %v923 = vpack.c.b16 %v914, %v913
        %v924 = vpack.c.b16 %v916, %v915
        %933 = vmatpush.bf16.msra.mxu0 %v924
        %934 = vmatpush.bf16.msra.mxu0 %v923
        %935 = vmatpush.bf16.msra.mxu0 %v922
        %936 = vmatpush.bf16.msra.mxu0 %v921
        %937 = vmatpush.bf16.msra.mxu0 %v920
        %938 = vmatpush.bf16.msra.mxu0 %v919
        %939 = vmatpush.bf16.msra.mxu0 %v918
        %940 = vmatpush.bf16.msra.mxu0 %v917
        %941 = vmatmul.bf16.gmra.mxu0 0
        %v942 = vpop.f32.mrf.mxu0
        %v943 = vadd.f32 0.0, %v942
        %v944 = vpop.f32.mrf.mxu0
        %v945 = vadd.f32 0.0, %v944
        %946 = vmatmul.bf16.gmra.mxu0 %v530
        %v947 = vpop.f32.mrf.mxu0
        %v948 = vadd.f32 0.0, %v947
        %v949 = vpop.f32.mrf.mxu0
        %v950 = vadd.f32 0.0, %v949
        %951 = vmatmul.bf16.gmra.mxu0 %v531
        %v952 = vpop.f32.mrf.mxu0
        %v953 = vadd.f32 0.0, %v952
        %v954 = vpop.f32.mrf.mxu0
        %v955 = vadd.f32 0.0, %v954
        %956 = vmatmul.bf16.gmra.mxu0 %v532
        %v957 = vpop.f32.mrf.mxu0
        %v958 = vadd.f32 0.0, %v957
        %v959 = vpop.f32.mrf.mxu0
        %v960 = vadd.f32 0.0, %v959
        %961 = vmatmul.bf16.gmra.mxu0 %v533
        %v962 = vpop.f32.mrf.mxu0
        %v963 = vadd.f32 0.0, %v962
        %v964 = vpop.f32.mrf.mxu0
        %v965 = vadd.f32 0.0, %v964
        %966 = vmatmul.bf16.gmra.mxu0 %v534
        %v967 = vpop.f32.mrf.mxu0
        %v968 = vadd.f32 0.0, %v967
        %v969 = vpop.f32.mrf.mxu0
        %v970 = vadd.f32 0.0, %v969
        %971 = vmatmul.bf16.gmra.mxu0 %v535
        %v972 = vpop.f32.mrf.mxu0
        %v973 = vadd.f32 0.0, %v972
        %v974 = vpop.f32.mrf.mxu0
        %v975 = vadd.f32 0.0, %v974
        %976 = vmatmul.bf16.gmra.mxu0 %v536
        %v977 = vpop.f32.mrf.mxu0
        %v978 = vadd.f32 0.0, %v977
        %v979 = vpop.f32.mrf.mxu0
        %v980 = vadd.f32 0.0, %v979
        %981 = vmatmul.bf16.gmra.mxu0 %v537
        %v982 = vpop.f32.mrf.mxu0
        %v983 = vadd.f32 0.0, %v982
        %v984 = vpop.f32.mrf.mxu0
        %v985 = vadd.f32 0.0, %v984
        %986 = vmatmul.bf16.gmra.mxu0 %v538
        %v987 = vpop.f32.mrf.mxu0
        %v988 = vadd.f32 0.0, %v987
        %v989 = vpop.f32.mrf.mxu0
        %v990 = vadd.f32 0.0, %v989
        %991 = vmatmul.bf16.gmra.mxu0 %v539
        %v992 = vpop.f32.mrf.mxu0
        %v993 = vadd.f32 0.0, %v992
        %v994 = vpop.f32.mrf.mxu0
        %v995 = vadd.f32 0.0, %v994
        %996 = vmatmul.bf16.gmra.mxu0 %v540
        %v997 = vpop.f32.mrf.mxu0
        %v998 = vadd.f32 0.0, %v997
        %v999 = vpop.f32.mrf.mxu0
        %v1000 = vadd.f32 0.0, %v999
        %1001 = vmatmul.bf16.gmra.mxu0 %v541
        %v1002 = vpop.f32.mrf.mxu0
        %v1003 = vadd.f32 0.0, %v1002
        %v1004 = vpop.f32.mrf.mxu0
        %v1005 = vadd.f32 0.0, %v1004
        %1006 = vmatmul.bf16.gmra.mxu0 %v542
        %v1007 = vpop.f32.mrf.mxu0
        %v1008 = vadd.f32 0.0, %v1007
        %v1009 = vpop.f32.mrf.mxu0
        %v1010 = vadd.f32 0.0, %v1009
        %1011 = vmatmul.bf16.gmra.mxu0 %v543
        %v1012 = vpop.f32.mrf.mxu0
        %v1013 = vadd.f32 0.0, %v1012
        %v1014 = vpop.f32.mrf.mxu0
        %v1015 = vadd.f32 0.0, %v1014
        %1016 = vmatmul.bf16.gmra.mxu0 %v544
        %v1017 = vpop.f32.mrf.mxu0
        %v1018 = vadd.f32 0.0, %v1017
        %v1019 = vpop.f32.mrf.mxu0
        %v1020 = vadd.f32 0.0, %v1019
        %1021 = vdwg.mxu0
        %v1022 = vadd.f32 %v789, %v943
        %v1023 = vadd.f32 %v791, %v945
        %v1024 = vadd.f32 %v794, %v948
        %v1025 = vadd.f32 %v796, %v950
        %v1026 = vadd.f32 %v799, %v953
        %v1027 = vadd.f32 %v801, %v955
        %v1028 = vadd.f32 %v804, %v958
        %v1029 = vadd.f32 %v806, %v960
        %v1030 = vadd.f32 %v809, %v963
        %v1031 = vadd.f32 %v811, %v965
        %v1032 = vadd.f32 %v814, %v968
        %v1033 = vadd.f32 %v816, %v970
        %v1034 = vadd.f32 %v819, %v973
        %v1035 = vadd.f32 %v821, %v975
        %v1036 = vadd.f32 %v824, %v978
        %v1037 = vadd.f32 %v826, %v980
        %v1038 = vadd.f32 %v829, %v983
        %v1039 = vadd.f32 %v831, %v985
        %v1040 = vadd.f32 %v834, %v988
        %v1041 = vadd.f32 %v836, %v990
        %v1042 = vadd.f32 %v839, %v993
        %v1043 = vadd.f32 %v841, %v995
        %v1044 = vadd.f32 %v844, %v998
        %v1045 = vadd.f32 %v846, %v1000
        %v1046 = vadd.f32 %v849, %v1003
        %v1047 = vadd.f32 %v851, %v1005
        %v1048 = vadd.f32 %v854, %v1008
        %v1049 = vadd.f32 %v856, %v1010
        %v1050 = vadd.f32 %v859, %v1013
        %v1051 = vadd.f32 %v861, %v1015
        %v1052 = vadd.f32 %v864, %v1018
        %v1053 = vadd.f32 %v866, %v1020
        %s1054 = scalar_lea.vmem [#allocation5], 192
        %v1055 = vld [vmem:[%s1054] sm:$0xf]
        %v1056 = vld [vmem:[%s1054 + $0x4] sm:$0xf]
        %v1057 = vld [vmem:[%s1054 + $0x8] sm:$0xf]
        %v1058 = vld [vmem:[%s1054 + $0xc] sm:$0xf]
        %v1059 = vld [vmem:[%s1054 + $0x10] sm:$0xf]
        %v1060 = vld [vmem:[%s1054 + $0x14] sm:$0xf]
        %v1061 = vld [vmem:[%s1054 + $0x18] sm:$0xf]
        %v1062 = vld [vmem:[%s1054 + $0x1c] sm:$0xf]
        %v1063 = vld [vmem:[%s1054 + $0x20] sm:$0xf]
        %v1064 = vld [vmem:[%s1054 + $0x24] sm:$0xf]
        %v1065 = vld [vmem:[%s1054 + $0x28] sm:$0xf]
        %v1066 = vld [vmem:[%s1054 + $0x2c] sm:$0xf]
        %v1067 = vld [vmem:[%s1054 + $0x30] sm:$0xf]
        %v1068 = vld [vmem:[%s1054 + $0x34] sm:$0xf]
        %v1069 = vld [vmem:[%s1054 + $0x38] sm:$0xf]
        %v1070 = vld [vmem:[%s1054 + $0x3c] sm:$0xf]
        %v1087 = vunpack.c.l.b16 %v1055
        %v1088 = vunpack.c.l.b16 %v1056
        %v1089 = vunpack.c.l.b16 %v1057
        %v1090 = vunpack.c.l.b16 %v1058
        %v1091 = vunpack.c.l.b16 %v1059
        %v1092 = vunpack.c.l.b16 %v1060
        %v1093 = vunpack.c.l.b16 %v1061
        %v1094 = vunpack.c.l.b16 %v1062
        %v1095 = vunpack.c.l.b16 %v1063
        %v1096 = vunpack.c.l.b16 %v1064
        %v1097 = vunpack.c.l.b16 %v1065
        %v1098 = vunpack.c.l.b16 %v1066
        %v1099 = vunpack.c.l.b16 %v1067
        %v1100 = vunpack.c.l.b16 %v1068
        %v1101 = vunpack.c.l.b16 %v1069
        %v1102 = vunpack.c.l.b16 %v1070
        %v1103 = vpack.c.b16 %v1088, %v1087
        %v1104 = vpack.c.b16 %v1090, %v1089
        %v1105 = vpack.c.b16 %v1092, %v1091
        %v1106 = vpack.c.b16 %v1094, %v1093
        %v1107 = vpack.c.b16 %v1096, %v1095
        %v1108 = vpack.c.b16 %v1098, %v1097
        %v1109 = vpack.c.b16 %v1100, %v1099
        %v1110 = vpack.c.b16 %v1102, %v1101
        %1119 = vmatpush.bf16.msra.mxu0 %v1110
        %1120 = vmatpush.bf16.msra.mxu0 %v1109
        %1121 = vmatpush.bf16.msra.mxu0 %v1108
        %1122 = vmatpush.bf16.msra.mxu0 %v1107
        %1123 = vmatpush.bf16.msra.mxu0 %v1106
        %1124 = vmatpush.bf16.msra.mxu0 %v1105
        %1125 = vmatpush.bf16.msra.mxu0 %v1104
        %1126 = vmatpush.bf16.msra.mxu0 %v1103
        %1127 = vmatmul.bf16.gmra.mxu0 %v463
        %v1128 = vpop.f32.mrf.mxu0
        %v1129 = vadd.f32 0.0, %v1128
        %v1130 = vpop.f32.mrf.mxu0
        %v1131 = vadd.f32 0.0, %v1130
        %1132 = vmatmul.bf16.gmra.mxu0 %v464
        %v1133 = vpop.f32.mrf.mxu0
        %v1134 = vadd.f32 0.0, %v1133
        %v1135 = vpop.f32.mrf.mxu0
        %v1136 = vadd.f32 0.0, %v1135
        %1137 = vmatmul.bf16.gmra.mxu0 %v465
        %v1138 = vpop.f32.mrf.mxu0
        %v1139 = vadd.f32 0.0, %v1138
        %v1140 = vpop.f32.mrf.mxu0
        %v1141 = vadd.f32 0.0, %v1140
        %1142 = vmatmul.bf16.gmra.mxu0 %v466
        %v1143 = vpop.f32.mrf.mxu0
        %v1144 = vadd.f32 0.0, %v1143
        %v1145 = vpop.f32.mrf.mxu0
        %v1146 = vadd.f32 0.0, %v1145
        %1147 = vmatmul.bf16.gmra.mxu0 %v467
        %v1148 = vpop.f32.mrf.mxu0
        %v1149 = vadd.f32 0.0, %v1148
        %v1150 = vpop.f32.mrf.mxu0
        %v1151 = vadd.f32 0.0, %v1150
        %1152 = vmatmul.bf16.gmra.mxu0 %v468
        %v1153 = vpop.f32.mrf.mxu0
        %v1154 = vadd.f32 0.0, %v1153
        %v1155 = vpop.f32.mrf.mxu0
        %v1156 = vadd.f32 0.0, %v1155
        %1157 = vmatmul.bf16.gmra.mxu0 %v469
        %v1158 = vpop.f32.mrf.mxu0
        %v1159 = vadd.f32 0.0, %v1158
        %v1160 = vpop.f32.mrf.mxu0
        %v1161 = vadd.f32 0.0, %v1160
        %1162 = vmatmul.bf16.gmra.mxu0 %v470
        %v1163 = vpop.f32.mrf.mxu0
        %v1164 = vadd.f32 0.0, %v1163
        %v1165 = vpop.f32.mrf.mxu0
        %v1166 = vadd.f32 0.0, %v1165
        %1167 = vmatmul.bf16.gmra.mxu0 %v471
        %v1168 = vpop.f32.mrf.mxu0
        %v1169 = vadd.f32 0.0, %v1168
        %v1170 = vpop.f32.mrf.mxu0
        %v1171 = vadd.f32 0.0, %v1170
        %1172 = vmatmul.bf16.gmra.mxu0 %v472
        %v1173 = vpop.f32.mrf.mxu0
        %v1174 = vadd.f32 0.0, %v1173
        %v1175 = vpop.f32.mrf.mxu0
        %v1176 = vadd.f32 0.0, %v1175
        %1177 = vmatmul.bf16.gmra.mxu0 %v473
        %v1178 = vpop.f32.mrf.mxu0
        %v1179 = vadd.f32 0.0, %v1178
        %v1180 = vpop.f32.mrf.mxu0
        %v1181 = vadd.f32 0.0, %v1180
        %1182 = vmatmul.bf16.gmra.mxu0 %v474
        %v1183 = vpop.f32.mrf.mxu0
        %v1184 = vadd.f32 0.0, %v1183
        %v1185 = vpop.f32.mrf.mxu0
        %v1186 = vadd.f32 0.0, %v1185
        %1187 = vmatmul.bf16.gmra.mxu0 %v475
        %v1188 = vpop.f32.mrf.mxu0
        %v1189 = vadd.f32 0.0, %v1188
        %v1190 = vpop.f32.mrf.mxu0
        %v1191 = vadd.f32 0.0, %v1190
        %1192 = vmatmul.bf16.gmra.mxu0 %v476
        %v1193 = vpop.f32.mrf.mxu0
        %v1194 = vadd.f32 0.0, %v1193
        %v1195 = vpop.f32.mrf.mxu0
        %v1196 = vadd.f32 0.0, %v1195
        %1197 = vmatmul.bf16.gmra.mxu0 %v477
        %v1198 = vpop.f32.mrf.mxu0
        %v1199 = vadd.f32 0.0, %v1198
        %v1200 = vpop.f32.mrf.mxu0
        %v1201 = vadd.f32 0.0, %v1200
        %1202 = vmatmul.bf16.gmra.mxu0 %v478
        %v1203 = vpop.f32.mrf.mxu0
        %v1204 = vadd.f32 0.0, %v1203
        %v1205 = vpop.f32.mrf.mxu0
        %v1206 = vadd.f32 0.0, %v1205
        %1207 = vdwg.mxu0
        %v1208 = vadd.f32 %v1022, %v1129
        %v1209 = vadd.f32 %v1023, %v1131
        %v1210 = vadd.f32 %v1024, %v1134
        %v1211 = vadd.f32 %v1025, %v1136
        %v1212 = vadd.f32 %v1026, %v1139
        %v1213 = vadd.f32 %v1027, %v1141
        %v1214 = vadd.f32 %v1028, %v1144
        %v1215 = vadd.f32 %v1029, %v1146
        %v1216 = vadd.f32 %v1030, %v1149
        %v1217 = vadd.f32 %v1031, %v1151
        %v1218 = vadd.f32 %v1032, %v1154
        %v1219 = vadd.f32 %v1033, %v1156
        %v1220 = vadd.f32 %v1034, %v1159
        %v1221 = vadd.f32 %v1035, %v1161
        %v1222 = vadd.f32 %v1036, %v1164
        %v1223 = vadd.f32 %v1037, %v1166
        %v1224 = vadd.f32 %v1038, %v1169
        %v1225 = vadd.f32 %v1039, %v1171
        %v1226 = vadd.f32 %v1040, %v1174
        %v1227 = vadd.f32 %v1041, %v1176
        %v1228 = vadd.f32 %v1042, %v1179
        %v1229 = vadd.f32 %v1043, %v1181
        %v1230 = vadd.f32 %v1044, %v1184
        %v1231 = vadd.f32 %v1045, %v1186
        %v1232 = vadd.f32 %v1046, %v1189
        %v1233 = vadd.f32 %v1047, %v1191
        %v1234 = vadd.f32 %v1048, %v1194
        %v1235 = vadd.f32 %v1049, %v1196
        %v1236 = vadd.f32 %v1050, %v1199
        %v1237 = vadd.f32 %v1051, %v1201
        %v1238 = vadd.f32 %v1052, %v1204
        %v1239 = vadd.f32 %v1053, %v1206
        %s1240 = scalar_lea.vmem [#allocation5], 256
        %v1241 = vld [vmem:[%s1240] sm:$0xf]
        %v1242 = vld [vmem:[%s1240 + $0x4] sm:$0xf]
        %v1243 = vld [vmem:[%s1240 + $0x8] sm:$0xf]
        %v1244 = vld [vmem:[%s1240 + $0xc] sm:$0xf]
        %v1245 = vld [vmem:[%s1240 + $0x10] sm:$0xf]
        %v1246 = vld [vmem:[%s1240 + $0x14] sm:$0xf]
        %v1247 = vld [vmem:[%s1240 + $0x18] sm:$0xf]
        %v1248 = vld [vmem:[%s1240 + $0x1c] sm:$0xf]
        %v1249 = vld [vmem:[%s1240 + $0x20] sm:$0xf]
        %v1250 = vld [vmem:[%s1240 + $0x24] sm:$0xf]
        %v1251 = vld [vmem:[%s1240 + $0x28] sm:$0xf]
        %v1252 = vld [vmem:[%s1240 + $0x2c] sm:$0xf]
        %v1253 = vld [vmem:[%s1240 + $0x30] sm:$0xf]
        %v1254 = vld [vmem:[%s1240 + $0x34] sm:$0xf]
        %v1255 = vld [vmem:[%s1240 + $0x38] sm:$0xf]
        %v1256 = vld [vmem:[%s1240 + $0x3c] sm:$0xf]
        %v1274 = vunpack.c.l.b16 %v1241
        %v1275 = vunpack.c.l.b16 %v1242
        %v1276 = vunpack.c.l.b16 %v1243
        %v1277 = vunpack.c.l.b16 %v1244
        %v1278 = vunpack.c.l.b16 %v1245
        %v1279 = vunpack.c.l.b16 %v1246
        %v1280 = vunpack.c.l.b16 %v1247
        %v1281 = vunpack.c.l.b16 %v1248
        %v1282 = vunpack.c.l.b16 %v1249
        %v1283 = vunpack.c.l.b16 %v1250
        %v1284 = vunpack.c.l.b16 %v1251
        %v1285 = vunpack.c.l.b16 %v1252
        %v1286 = vunpack.c.l.b16 %v1253
        %v1287 = vunpack.c.l.b16 %v1254
        %v1288 = vunpack.c.l.b16 %v1255
        %v1289 = vunpack.c.l.b16 %v1256
        %v1290 = vpack.c.b16 %v1275, %v1274
        %v1291 = vpack.c.b16 %v1277, %v1276
        %v1292 = vpack.c.b16 %v1279, %v1278
        %v1293 = vpack.c.b16 %v1281, %v1280
        %v1294 = vpack.c.b16 %v1283, %v1282
        %v1295 = vpack.c.b16 %v1285, %v1284
        %v1296 = vpack.c.b16 %v1287, %v1286
        %v1297 = vpack.c.b16 %v1289, %v1288
        %1306 = vmatpush.bf16.msra.mxu0 %v1297
        %1307 = vmatpush.bf16.msra.mxu0 %v1296
        %1308 = vmatpush.bf16.msra.mxu0 %v1295
        %1309 = vmatpush.bf16.msra.mxu0 %v1294
        %1310 = vmatpush.bf16.msra.mxu0 %v1293
        %1311 = vmatpush.bf16.msra.mxu0 %v1292
        %1312 = vmatpush.bf16.msra.mxu0 %v1291
        %1313 = vmatpush.bf16.msra.mxu0 %v1290
        %1314 = vmatmul.bf16.gmra.mxu0 %v316
        %v1315 = vpop.f32.mrf.mxu0
        %v1316 = vadd.f32 0.0, %v1315
        %v1317 = vpop.f32.mrf.mxu0
        %v1318 = vadd.f32 0.0, %v1317
        %1319 = vmatmul.bf16.gmra.mxu0 %v317
        %v1320 = vpop.f32.mrf.mxu0
        %v1321 = vadd.f32 0.0, %v1320
        %v1322 = vpop.f32.mrf.mxu0
        %v1323 = vadd.f32 0.0, %v1322
        %1324 = vmatmul.bf16.gmra.mxu0 %v318
        %v1325 = vpop.f32.mrf.mxu0
        %v1326 = vadd.f32 0.0, %v1325
        %v1327 = vpop.f32.mrf.mxu0
        %v1328 = vadd.f32 0.0, %v1327
        %1329 = vmatmul.bf16.gmra.mxu0 %v319
        %v1330 = vpop.f32.mrf.mxu0
        %v1331 = vadd.f32 0.0, %v1330
        %v1332 = vpop.f32.mrf.mxu0
        %v1333 = vadd.f32 0.0, %v1332
        %1334 = vmatmul.bf16.gmra.mxu0 %v320
        %v1335 = vpop.f32.mrf.mxu0
        %v1336 = vadd.f32 0.0, %v1335
        %v1337 = vpop.f32.mrf.mxu0
        %v1338 = vadd.f32 0.0, %v1337
        %1339 = vmatmul.bf16.gmra.mxu0 %v321
        %v1340 = vpop.f32.mrf.mxu0
        %v1341 = vadd.f32 0.0, %v1340
        %v1342 = vpop.f32.mrf.mxu0
        %v1343 = vadd.f32 0.0, %v1342
        %1344 = vmatmul.bf16.gmra.mxu0 %v322
        %v1345 = vpop.f32.mrf.mxu0
        %v1346 = vadd.f32 0.0, %v1345
        %v1347 = vpop.f32.mrf.mxu0
        %v1348 = vadd.f32 0.0, %v1347
        %1349 = vmatmul.bf16.gmra.mxu0 %v323
        %v1350 = vpop.f32.mrf.mxu0
        %v1351 = vadd.f32 0.0, %v1350
        %v1352 = vpop.f32.mrf.mxu0
        %v1353 = vadd.f32 0.0, %v1352
        %1354 = vmatmul.bf16.gmra.mxu0 %v324
        %v1355 = vpop.f32.mrf.mxu0
        %v1356 = vadd.f32 0.0, %v1355
        %v1357 = vpop.f32.mrf.mxu0
        %v1358 = vadd.f32 0.0, %v1357
        %1359 = vmatmul.bf16.gmra.mxu0 %v325
        %v1360 = vpop.f32.mrf.mxu0
        %v1361 = vadd.f32 0.0, %v1360
        %v1362 = vpop.f32.mrf.mxu0
        %v1363 = vadd.f32 0.0, %v1362
        %1364 = vmatmul.bf16.gmra.mxu0 %v326
        %v1365 = vpop.f32.mrf.mxu0
        %v1366 = vadd.f32 0.0, %v1365
        %v1367 = vpop.f32.mrf.mxu0
        %v1368 = vadd.f32 0.0, %v1367
        %1369 = vmatmul.bf16.gmra.mxu0 %v327
        %v1370 = vpop.f32.mrf.mxu0
        %v1371 = vadd.f32 0.0, %v1370
        %v1372 = vpop.f32.mrf.mxu0
        %v1373 = vadd.f32 0.0, %v1372
        %1374 = vmatmul.bf16.gmra.mxu0 %v328
        %v1375 = vpop.f32.mrf.mxu0
        %v1376 = vadd.f32 0.0, %v1375
        %v1377 = vpop.f32.mrf.mxu0
        %v1378 = vadd.f32 0.0, %v1377
        %1379 = vmatmul.bf16.gmra.mxu0 %v329
        %v1380 = vpop.f32.mrf.mxu0
        %v1381 = vadd.f32 0.0, %v1380
        %v1382 = vpop.f32.mrf.mxu0
        %v1383 = vadd.f32 0.0, %v1382
        %1384 = vmatmul.bf16.gmra.mxu0 %v330
        %v1385 = vpop.f32.mrf.mxu0
        %v1386 = vadd.f32 0.0, %v1385
        %v1387 = vpop.f32.mrf.mxu0
        %v1388 = vadd.f32 0.0, %v1387
        %1389 = vmatmul.bf16.gmra.mxu0 %v331
        %v1390 = vpop.f32.mrf.mxu0
        %v1391 = vadd.f32 0.0, %v1390
        %v1392 = vpop.f32.mrf.mxu0
        %v1393 = vadd.f32 0.0, %v1392
        %1394 = vdwg.mxu0
        %v1395 = vadd.f32 %v1208, %v1316
        %v1396 = vadd.f32 %v1209, %v1318
        %v1397 = vadd.f32 %v1210, %v1321
        %v1398 = vadd.f32 %v1211, %v1323
        %v1399 = vadd.f32 %v1212, %v1326
        %v1400 = vadd.f32 %v1213, %v1328
        %v1401 = vadd.f32 %v1214, %v1331
        %v1402 = vadd.f32 %v1215, %v1333
        %v1403 = vadd.f32 %v1216, %v1336
        %v1404 = vadd.f32 %v1217, %v1338
        %v1405 = vadd.f32 %v1218, %v1341
        %v1406 = vadd.f32 %v1219, %v1343
        %v1407 = vadd.f32 %v1220, %v1346
        %v1408 = vadd.f32 %v1221, %v1348
        %v1409 = vadd.f32 %v1222, %v1351
        %v1410 = vadd.f32 %v1223, %v1353
        %v1411 = vadd.f32 %v1224, %v1356
        %v1412 = vadd.f32 %v1225, %v1358
        %v1413 = vadd.f32 %v1226, %v1361
        %v1414 = vadd.f32 %v1227, %v1363
        %v1415 = vadd.f32 %v1228, %v1366
        %v1416 = vadd.f32 %v1229, %v1368
        %v1417 = vadd.f32 %v1230, %v1371
        %v1418 = vadd.f32 %v1231, %v1373
        %v1419 = vadd.f32 %v1232, %v1376
        %v1420 = vadd.f32 %v1233, %v1378
        %v1421 = vadd.f32 %v1234, %v1381
        %v1422 = vadd.f32 %v1235, %v1383
        %v1423 = vadd.f32 %v1236, %v1386
        %v1424 = vadd.f32 %v1237, %v1388
        %v1425 = vadd.f32 %v1238, %v1391
        %v1426 = vadd.f32 %v1239, %v1393
        %s1427 = scalar_lea.vmem [#allocation5], 320
        %v1428 = vld [vmem:[%s1427] sm:$0xf]
        %v1429 = vld [vmem:[%s1427 + $0x4] sm:$0xf]
        %v1430 = vld [vmem:[%s1427 + $0x8] sm:$0xf]
        %v1431 = vld [vmem:[%s1427 + $0xc] sm:$0xf]
        %v1432 = vld [vmem:[%s1427 + $0x10] sm:$0xf]
        %v1433 = vld [vmem:[%s1427 + $0x14] sm:$0xf]
        %v1434 = vld [vmem:[%s1427 + $0x18] sm:$0xf]
        %v1435 = vld [vmem:[%s1427 + $0x1c] sm:$0xf]
        %v1436 = vld [vmem:[%s1427 + $0x20] sm:$0xf]
        %v1437 = vld [vmem:[%s1427 + $0x24] sm:$0xf]
        %v1438 = vld [vmem:[%s1427 + $0x28] sm:$0xf]
        %v1439 = vld [vmem:[%s1427 + $0x2c] sm:$0xf]
        %v1440 = vld [vmem:[%s1427 + $0x30] sm:$0xf]
        %v1441 = vld [vmem:[%s1427 + $0x34] sm:$0xf]
        %v1442 = vld [vmem:[%s1427 + $0x38] sm:$0xf]
        %v1443 = vld [vmem:[%s1427 + $0x3c] sm:$0xf]
        %v1460 = vunpack.c.l.b16 %v1428
        %v1461 = vunpack.c.l.b16 %v1429
        %v1462 = vunpack.c.l.b16 %v1430
        %v1463 = vunpack.c.l.b16 %v1431
        %v1464 = vunpack.c.l.b16 %v1432
        %v1465 = vunpack.c.l.b16 %v1433
        %v1466 = vunpack.c.l.b16 %v1434
        %v1467 = vunpack.c.l.b16 %v1435
        %v1468 = vunpack.c.l.b16 %v1436
        %v1469 = vunpack.c.l.b16 %v1437
        %v1470 = vunpack.c.l.b16 %v1438
        %v1471 = vunpack.c.l.b16 %v1439
        %v1472 = vunpack.c.l.b16 %v1440
        %v1473 = vunpack.c.l.b16 %v1441
        %v1474 = vunpack.c.l.b16 %v1442
        %v1475 = vunpack.c.l.b16 %v1443
        %v1476 = vpack.c.b16 %v1461, %v1460
        %v1477 = vpack.c.b16 %v1463, %v1462
        %v1478 = vpack.c.b16 %v1465, %v1464
        %v1479 = vpack.c.b16 %v1467, %v1466
        %v1480 = vpack.c.b16 %v1469, %v1468
        %v1481 = vpack.c.b16 %v1471, %v1470
        %v1482 = vpack.c.b16 %v1473, %v1472
        %v1483 = vpack.c.b16 %v1475, %v1474
        %1492 = vmatpush.bf16.msra.mxu0 %v1483
        %1493 = vmatpush.bf16.msra.mxu0 %v1482
        %1494 = vmatpush.bf16.msra.mxu0 %v1481
        %1495 = vmatpush.bf16.msra.mxu0 %v1480
        %1496 = vmatpush.bf16.msra.mxu0 %v1479
        %1497 = vmatpush.bf16.msra.mxu0 %v1478
        %1498 = vmatpush.bf16.msra.mxu0 %v1477
        %1499 = vmatpush.bf16.msra.mxu0 %v1476
        %1500 = vmatmul.bf16.gmra.mxu0 %v530
        %v1501 = vpop.f32.mrf.mxu0
        %v1502 = vadd.f32 0.0, %v1501
        %v1503 = vpop.f32.mrf.mxu0
        %v1504 = vadd.f32 0.0, %v1503
        %1505 = vmatmul.bf16.gmra.mxu0 %v531
        %v1506 = vpop.f32.mrf.mxu0
        %v1507 = vadd.f32 0.0, %v1506
        %v1508 = vpop.f32.mrf.mxu0
        %v1509 = vadd.f32 0.0, %v1508
        %1510 = vmatmul.bf16.gmra.mxu0 %v532
        %v1511 = vpop.f32.mrf.mxu0
        %v1512 = vadd.f32 0.0, %v1511
        %v1513 = vpop.f32.mrf.mxu0
        %v1514 = vadd.f32 0.0, %v1513
        %1515 = vmatmul.bf16.gmra.mxu0 %v533
        %v1516 = vpop.f32.mrf.mxu0
        %v1517 = vadd.f32 0.0, %v1516
        %v1518 = vpop.f32.mrf.mxu0
        %v1519 = vadd.f32 0.0, %v1518
        %1520 = vmatmul.bf16.gmra.mxu0 %v534
        %v1521 = vpop.f32.mrf.mxu0
        %v1522 = vadd.f32 0.0, %v1521
        %v1523 = vpop.f32.mrf.mxu0
        %v1524 = vadd.f32 0.0, %v1523
        %1525 = vmatmul.bf16.gmra.mxu0 %v535
        %v1526 = vpop.f32.mrf.mxu0
        %v1527 = vadd.f32 0.0, %v1526
        %v1528 = vpop.f32.mrf.mxu0
        %v1529 = vadd.f32 0.0, %v1528
        %1530 = vmatmul.bf16.gmra.mxu0 %v536
        %v1531 = vpop.f32.mrf.mxu0
        %v1532 = vadd.f32 0.0, %v1531
        %v1533 = vpop.f32.mrf.mxu0
        %v1534 = vadd.f32 0.0, %v1533
        %1535 = vmatmul.bf16.gmra.mxu0 %v537
        %v1536 = vpop.f32.mrf.mxu0
        %v1537 = vadd.f32 0.0, %v1536
        %v1538 = vpop.f32.mrf.mxu0
        %v1539 = vadd.f32 0.0, %v1538
        %1540 = vmatmul.bf16.gmra.mxu0 %v538
        %v1541 = vpop.f32.mrf.mxu0
        %v1542 = vadd.f32 0.0, %v1541
        %v1543 = vpop.f32.mrf.mxu0
        %v1544 = vadd.f32 0.0, %v1543
        %1545 = vmatmul.bf16.gmra.mxu0 %v539
        %v1546 = vpop.f32.mrf.mxu0
        %v1547 = vadd.f32 0.0, %v1546
        %v1548 = vpop.f32.mrf.mxu0
        %v1549 = vadd.f32 0.0, %v1548
        %1550 = vmatmul.bf16.gmra.mxu0 %v540
        %v1551 = vpop.f32.mrf.mxu0
        %v1552 = vadd.f32 0.0, %v1551
        %v1553 = vpop.f32.mrf.mxu0
        %v1554 = vadd.f32 0.0, %v1553
        %1555 = vmatmul.bf16.gmra.mxu0 %v541
        %v1556 = vpop.f32.mrf.mxu0
        %v1557 = vadd.f32 0.0, %v1556
        %v1558 = vpop.f32.mrf.mxu0
        %v1559 = vadd.f32 0.0, %v1558
        %1560 = vmatmul.bf16.gmra.mxu0 %v542
        %v1561 = vpop.f32.mrf.mxu0
        %v1562 = vadd.f32 0.0, %v1561
        %v1563 = vpop.f32.mrf.mxu0
        %v1564 = vadd.f32 0.0, %v1563
        %1565 = vmatmul.bf16.gmra.mxu0 %v543
        %v1566 = vpop.f32.mrf.mxu0
        %v1567 = vadd.f32 0.0, %v1566
        %v1568 = vpop.f32.mrf.mxu0
        %v1569 = vadd.f32 0.0, %v1568
        %1570 = vmatmul.bf16.gmra.mxu0 %v544
        %v1571 = vpop.f32.mrf.mxu0
        %v1572 = vadd.f32 0.0, %v1571
        %v1573 = vpop.f32.mrf.mxu0
        %v1574 = vadd.f32 0.0, %v1573
        %1575 = vmatmul.bf16.gmra.mxu0 %v545
        %v1576 = vpop.f32.mrf.mxu0
        %v1577 = vadd.f32 0.0, %v1576
        %v1578 = vpop.f32.mrf.mxu0
        %v1579 = vadd.f32 0.0, %v1578
        %1580 = vdwg.mxu0
        %v1581 = vadd.f32 %v1395, %v1502
        %v1582 = vadd.f32 %v1396, %v1504
        %v1583 = vadd.f32 %v1397, %v1507
        %v1584 = vadd.f32 %v1398, %v1509
        %v1585 = vadd.f32 %v1399, %v1512
        %v1586 = vadd.f32 %v1400, %v1514
        %v1587 = vadd.f32 %v1401, %v1517
        %v1588 = vadd.f32 %v1402, %v1519
        %v1589 = vadd.f32 %v1403, %v1522
        %v1590 = vadd.f32 %v1404, %v1524
        %v1591 = vadd.f32 %v1405, %v1527
        %v1592 = vadd.f32 %v1406, %v1529
        %v1593 = vadd.f32 %v1407, %v1532
        %v1594 = vadd.f32 %v1408, %v1534
        %v1595 = vadd.f32 %v1409, %v1537
        %v1596 = vadd.f32 %v1410, %v1539
        %v1597 = vadd.f32 %v1411, %v1542
        %v1598 = vadd.f32 %v1412, %v1544
        %v1599 = vadd.f32 %v1413, %v1547
        %v1600 = vadd.f32 %v1414, %v1549
        %v1601 = vadd.f32 %v1415, %v1552
        %v1602 = vadd.f32 %v1416, %v1554
        %v1603 = vadd.f32 %v1417, %v1557
        %v1604 = vadd.f32 %v1418, %v1559
        %v1605 = vadd.f32 %v1419, %v1562
        %v1606 = vadd.f32 %v1420, %v1564
        %v1607 = vadd.f32 %v1421, %v1567
        %v1608 = vadd.f32 %v1422, %v1569
        %v1609 = vadd.f32 %v1423, %v1572
        %v1610 = vadd.f32 %v1424, %v1574
        %v1611 = vadd.f32 %v1425, %v1577
        %v1612 = vadd.f32 %v1426, %v1579
        %s1613 = scalar_lea.vmem [#allocation5], 384
        %v1614 = vld [vmem:[%s1613] sm:$0xf]
        %v1615 = vld [vmem:[%s1613 + $0x4] sm:$0xf]
        %v1616 = vld [vmem:[%s1613 + $0x8] sm:$0xf]
        %v1617 = vld [vmem:[%s1613 + $0xc] sm:$0xf]
        %v1618 = vld [vmem:[%s1613 + $0x10] sm:$0xf]
        %v1619 = vld [vmem:[%s1613 + $0x14] sm:$0xf]
        %v1620 = vld [vmem:[%s1613 + $0x18] sm:$0xf]
        %v1621 = vld [vmem:[%s1613 + $0x1c] sm:$0xf]
        %v1622 = vld [vmem:[%s1613 + $0x20] sm:$0xf]
        %v1623 = vld [vmem:[%s1613 + $0x24] sm:$0xf]
        %v1624 = vld [vmem:[%s1613 + $0x28] sm:$0xf]
        %v1625 = vld [vmem:[%s1613 + $0x2c] sm:$0xf]
        %v1626 = vld [vmem:[%s1613 + $0x30] sm:$0xf]
        %v1627 = vld [vmem:[%s1613 + $0x34] sm:$0xf]
        %v1628 = vld [vmem:[%s1613 + $0x38] sm:$0xf]
        %v1629 = vld [vmem:[%s1613 + $0x3c] sm:$0xf]
        %v1646 = vunpack.c.l.b16 %v1614
        %v1647 = vunpack.c.l.b16 %v1615
        %v1648 = vunpack.c.l.b16 %v1616
        %v1649 = vunpack.c.l.b16 %v1617
        %v1650 = vunpack.c.l.b16 %v1618
        %v1651 = vunpack.c.l.b16 %v1619
        %v1652 = vunpack.c.l.b16 %v1620
        %v1653 = vunpack.c.l.b16 %v1621
        %v1654 = vunpack.c.l.b16 %v1622
        %v1655 = vunpack.c.l.b16 %v1623
        %v1656 = vunpack.c.l.b16 %v1624
        %v1657 = vunpack.c.l.b16 %v1625
        %v1658 = vunpack.c.l.b16 %v1626
        %v1659 = vunpack.c.l.b16 %v1627
        %v1660 = vunpack.c.l.b16 %v1628
        %v1661 = vunpack.c.l.b16 %v1629
        %v1662 = vpack.c.b16 %v1647, %v1646
        %v1663 = vpack.c.b16 %v1649, %v1648
        %v1664 = vpack.c.b16 %v1651, %v1650
        %v1665 = vpack.c.b16 %v1653, %v1652
        %v1666 = vpack.c.b16 %v1655, %v1654
        %v1667 = vpack.c.b16 %v1657, %v1656
        %v1668 = vpack.c.b16 %v1659, %v1658
        %v1669 = vpack.c.b16 %v1661, %v1660
        %1678 = vmatpush.bf16.msra.mxu0 %v1669
        %1679 = vmatpush.bf16.msra.mxu0 %v1668
        %1680 = vmatpush.bf16.msra.mxu0 %v1667
        %1681 = vmatpush.bf16.msra.mxu0 %v1666
        %1682 = vmatpush.bf16.msra.mxu0 %v1665
        %1683 = vmatpush.bf16.msra.mxu0 %v1664
        %1684 = vmatpush.bf16.msra.mxu0 %v1663
        %1685 = vmatpush.bf16.msra.mxu0 %v1662
        %1686 = vmatmul.bf16.gmra.mxu0 %v464
        %v1687 = vpop.f32.mrf.mxu0
        %v1688 = vadd.f32 0.0, %v1687
        %v1689 = vpop.f32.mrf.mxu0
        %v1690 = vadd.f32 0.0, %v1689
        %1691 = vmatmul.bf16.gmra.mxu0 %v465
        %v1692 = vpop.f32.mrf.mxu0
        %v1693 = vadd.f32 0.0, %v1692
        %v1694 = vpop.f32.mrf.mxu0
        %v1695 = vadd.f32 0.0, %v1694
        %1696 = vmatmul.bf16.gmra.mxu0 %v466
        %v1697 = vpop.f32.mrf.mxu0
        %v1698 = vadd.f32 0.0, %v1697
        %v1699 = vpop.f32.mrf.mxu0
        %v1700 = vadd.f32 0.0, %v1699
        %1701 = vmatmul.bf16.gmra.mxu0 %v467
        %v1702 = vpop.f32.mrf.mxu0
        %v1703 = vadd.f32 0.0, %v1702
        %v1704 = vpop.f32.mrf.mxu0
        %v1705 = vadd.f32 0.0, %v1704
        %1706 = vmatmul.bf16.gmra.mxu0 %v468
        %v1707 = vpop.f32.mrf.mxu0
        %v1708 = vadd.f32 0.0, %v1707
        %v1709 = vpop.f32.mrf.mxu0
        %v1710 = vadd.f32 0.0, %v1709
        %1711 = vmatmul.bf16.gmra.mxu0 %v469
        %v1712 = vpop.f32.mrf.mxu0
        %v1713 = vadd.f32 0.0, %v1712
        %v1714 = vpop.f32.mrf.mxu0
        %v1715 = vadd.f32 0.0, %v1714
        %1716 = vmatmul.bf16.gmra.mxu0 %v470
        %v1717 = vpop.f32.mrf.mxu0
        %v1718 = vadd.f32 0.0, %v1717
        %v1719 = vpop.f32.mrf.mxu0
        %v1720 = vadd.f32 0.0, %v1719
        %1721 = vmatmul.bf16.gmra.mxu0 %v471
        %v1722 = vpop.f32.mrf.mxu0
        %v1723 = vadd.f32 0.0, %v1722
        %v1724 = vpop.f32.mrf.mxu0
        %v1725 = vadd.f32 0.0, %v1724
        %1726 = vmatmul.bf16.gmra.mxu0 %v472
        %v1727 = vpop.f32.mrf.mxu0
        %v1728 = vadd.f32 0.0, %v1727
        %v1729 = vpop.f32.mrf.mxu0
        %v1730 = vadd.f32 0.0, %v1729
        %1731 = vmatmul.bf16.gmra.mxu0 %v473
        %v1732 = vpop.f32.mrf.mxu0
        %v1733 = vadd.f32 0.0, %v1732
        %v1734 = vpop.f32.mrf.mxu0
        %v1735 = vadd.f32 0.0, %v1734
        %1736 = vmatmul.bf16.gmra.mxu0 %v474
        %v1737 = vpop.f32.mrf.mxu0
        %v1738 = vadd.f32 0.0, %v1737
        %v1739 = vpop.f32.mrf.mxu0
        %v1740 = vadd.f32 0.0, %v1739
        %1741 = vmatmul.bf16.gmra.mxu0 %v475
        %v1742 = vpop.f32.mrf.mxu0
        %v1743 = vadd.f32 0.0, %v1742
        %v1744 = vpop.f32.mrf.mxu0
        %v1745 = vadd.f32 0.0, %v1744
        %1746 = vmatmul.bf16.gmra.mxu0 %v476
        %v1747 = vpop.f32.mrf.mxu0
        %v1748 = vadd.f32 0.0, %v1747
        %v1749 = vpop.f32.mrf.mxu0
        %v1750 = vadd.f32 0.0, %v1749
        %1751 = vmatmul.bf16.gmra.mxu0 %v477
        %v1752 = vpop.f32.mrf.mxu0
        %v1753 = vadd.f32 0.0, %v1752
        %v1754 = vpop.f32.mrf.mxu0
        %v1755 = vadd.f32 0.0, %v1754
        %1756 = vmatmul.bf16.gmra.mxu0 %v478
        %v1757 = vpop.f32.mrf.mxu0
        %v1758 = vadd.f32 0.0, %v1757
        %v1759 = vpop.f32.mrf.mxu0
        %v1760 = vadd.f32 0.0, %v1759
        %1761 = vmatmul.bf16.gmra.mxu0 0
        %v1762 = vpop.f32.mrf.mxu0
        %v1763 = vadd.f32 0.0, %v1762
        %v1764 = vpop.f32.mrf.mxu0
        %v1765 = vadd.f32 0.0, %v1764
        %1766 = vdwg.mxu0
        %v1767 = vadd.f32 %v1581, %v1688
        %v1768 = vadd.f32 %v1582, %v1690
        %v1769 = vadd.f32 %v1583, %v1693
        %v1770 = vadd.f32 %v1584, %v1695
        %v1771 = vadd.f32 %v1585, %v1698
        %v1772 = vadd.f32 %v1586, %v1700
        %v1773 = vadd.f32 %v1587, %v1703
        %v1774 = vadd.f32 %v1588, %v1705
        %v1775 = vadd.f32 %v1589, %v1708
        %v1776 = vadd.f32 %v1590, %v1710
        %v1777 = vadd.f32 %v1591, %v1713
        %v1778 = vadd.f32 %v1592, %v1715
        %v1779 = vadd.f32 %v1593, %v1718
        %v1780 = vadd.f32 %v1594, %v1720
        %v1781 = vadd.f32 %v1595, %v1723
        %v1782 = vadd.f32 %v1596, %v1725
        %v1783 = vadd.f32 %v1597, %v1728
        %v1784 = vadd.f32 %v1598, %v1730
        %v1785 = vadd.f32 %v1599, %v1733
        %v1786 = vadd.f32 %v1600, %v1735
        %v1787 = vadd.f32 %v1601, %v1738
        %v1788 = vadd.f32 %v1602, %v1740
        %v1789 = vadd.f32 %v1603, %v1743
        %v1790 = vadd.f32 %v1604, %v1745
        %v1791 = vadd.f32 %v1605, %v1748
        %v1792 = vadd.f32 %v1606, %v1750
        %v1793 = vadd.f32 %v1607, %v1753
        %v1794 = vadd.f32 %v1608, %v1755
        %v1795 = vadd.f32 %v1609, %v1758
        %v1796 = vadd.f32 %v1610, %v1760
        %v1797 = vadd.f32 %v1611, %v1763
        %v1798 = vadd.f32 %v1612, %v1765
        %s1799 = scalar_lea.vmem [#allocation5], 448
        %v1800 = vld [vmem:[%s1799] sm:$0xf]
        %v1801 = vld [vmem:[%s1799 + $0x4] sm:$0xf]
        %v1802 = vld [vmem:[%s1799 + $0x8] sm:$0xf]
        %v1803 = vld [vmem:[%s1799 + $0xc] sm:$0xf]
        %v1804 = vld [vmem:[%s1799 + $0x10] sm:$0xf]
        %v1805 = vld [vmem:[%s1799 + $0x14] sm:$0xf]
        %v1806 = vld [vmem:[%s1799 + $0x18] sm:$0xf]
        %v1807 = vld [vmem:[%s1799 + $0x1c] sm:$0xf]
        %v1808 = vld [vmem:[%s1799 + $0x20] sm:$0xf]
        %v1809 = vld [vmem:[%s1799 + $0x24] sm:$0xf]
        %v1810 = vld [vmem:[%s1799 + $0x28] sm:$0xf]
        %v1811 = vld [vmem:[%s1799 + $0x2c] sm:$0xf]
        %v1812 = vld [vmem:[%s1799 + $0x30] sm:$0xf]
        %v1813 = vld [vmem:[%s1799 + $0x34] sm:$0xf]
        %v1814 = vld [vmem:[%s1799 + $0x38] sm:$0xf]
        %v1815 = vld [vmem:[%s1799 + $0x3c] sm:$0xf]
        %v1817 = vunpack.c.l.b16 0
        %v1818 = vpack.c.b16 %v1817, %v1817
        %v1836 = vunpack.c.l.b16 %v1800
        %v1837 = vunpack.c.l.b16 %v1801
        %v1838 = vunpack.c.l.b16 %v1802
        %v1839 = vunpack.c.l.b16 %v1803
        %v1840 = vunpack.c.l.b16 %v1804
        %v1841 = vunpack.c.l.b16 %v1805
        %v1842 = vunpack.c.l.b16 %v1806
        %v1843 = vunpack.c.l.b16 %v1807
        %v1844 = vunpack.c.l.b16 %v1808
        %v1845 = vunpack.c.l.b16 %v1809
        %v1846 = vunpack.c.l.b16 %v1810
        %v1847 = vunpack.c.l.b16 %v1811
        %v1848 = vunpack.c.l.b16 %v1812
        %v1849 = vunpack.c.l.b16 %v1813
        %v1850 = vunpack.c.l.b16 %v1814
        %v1851 = vunpack.c.l.b16 %v1815
        %v1852 = vpack.c.b16 %v1837, %v1836
        %v1853 = vpack.c.b16 %v1839, %v1838
        %v1854 = vpack.c.b16 %v1841, %v1840
        %v1855 = vpack.c.b16 %v1843, %v1842
        %v1856 = vpack.c.b16 %v1845, %v1844
        %v1857 = vpack.c.b16 %v1847, %v1846
        %v1858 = vpack.c.b16 %v1849, %v1848
        %v1859 = vpack.c.b16 %v1851, %v1850
        %1868 = vmatpush.bf16.msra.mxu0 %v1859
        %1869 = vmatpush.bf16.msra.mxu0 %v1858
        %1870 = vmatpush.bf16.msra.mxu0 %v1857
        %1871 = vmatpush.bf16.msra.mxu0 %v1856
        %1872 = vmatpush.bf16.msra.mxu0 %v1855
        %1873 = vmatpush.bf16.msra.mxu0 %v1854
        %1874 = vmatpush.bf16.msra.mxu0 %v1853
        %1875 = vmatpush.bf16.msra.mxu0 %v1852
        %1876 = vmatmul.bf16.gmra.mxu0 %v317
        %v1877 = vpop.f32.mrf.mxu0
        %v1878 = vadd.f32 0.0, %v1877
        %v1879 = vpop.f32.mrf.mxu0
        %v1880 = vadd.f32 0.0, %v1879
        %1881 = vmatmul.bf16.gmra.mxu0 %v318
        %v1882 = vpop.f32.mrf.mxu0
        %v1883 = vadd.f32 0.0, %v1882
        %v1884 = vpop.f32.mrf.mxu0
        %v1885 = vadd.f32 0.0, %v1884
        %1886 = vmatmul.bf16.gmra.mxu0 %v319
        %v1887 = vpop.f32.mrf.mxu0
        %v1888 = vadd.f32 0.0, %v1887
        %v1889 = vpop.f32.mrf.mxu0
        %v1890 = vadd.f32 0.0, %v1889
        %1891 = vmatmul.bf16.gmra.mxu0 %v320
        %v1892 = vpop.f32.mrf.mxu0
        %v1893 = vadd.f32 0.0, %v1892
        %v1894 = vpop.f32.mrf.mxu0
        %v1895 = vadd.f32 0.0, %v1894
        %1896 = vmatmul.bf16.gmra.mxu0 %v321
        %v1897 = vpop.f32.mrf.mxu0
        %v1898 = vadd.f32 0.0, %v1897
        %v1899 = vpop.f32.mrf.mxu0
        %v1900 = vadd.f32 0.0, %v1899
        %1901 = vmatmul.bf16.gmra.mxu0 %v322
        %v1902 = vpop.f32.mrf.mxu0
        %v1903 = vadd.f32 0.0, %v1902
        %v1904 = vpop.f32.mrf.mxu0
        %v1905 = vadd.f32 0.0, %v1904
        %1906 = vmatmul.bf16.gmra.mxu0 %v323
        %v1907 = vpop.f32.mrf.mxu0
        %v1908 = vadd.f32 0.0, %v1907
        %v1909 = vpop.f32.mrf.mxu0
        %v1910 = vadd.f32 0.0, %v1909
        %1911 = vmatmul.bf16.gmra.mxu0 %v324
        %v1912 = vpop.f32.mrf.mxu0
        %v1913 = vadd.f32 0.0, %v1912
        %v1914 = vpop.f32.mrf.mxu0
        %v1915 = vadd.f32 0.0, %v1914
        %1916 = vmatmul.bf16.gmra.mxu0 %v325
        %v1917 = vpop.f32.mrf.mxu0
        %v1918 = vadd.f32 0.0, %v1917
        %v1919 = vpop.f32.mrf.mxu0
        %v1920 = vadd.f32 0.0, %v1919
        %1921 = vmatmul.bf16.gmra.mxu0 %v326
        %v1922 = vpop.f32.mrf.mxu0
        %v1923 = vadd.f32 0.0, %v1922
        %v1924 = vpop.f32.mrf.mxu0
        %v1925 = vadd.f32 0.0, %v1924
        %1926 = vmatmul.bf16.gmra.mxu0 %v327
        %v1927 = vpop.f32.mrf.mxu0
        %v1928 = vadd.f32 0.0, %v1927
        %v1929 = vpop.f32.mrf.mxu0
        %v1930 = vadd.f32 0.0, %v1929
        %1931 = vmatmul.bf16.gmra.mxu0 %v328
        %v1932 = vpop.f32.mrf.mxu0
        %v1933 = vadd.f32 0.0, %v1932
        %v1934 = vpop.f32.mrf.mxu0
        %v1935 = vadd.f32 0.0, %v1934
        %1936 = vmatmul.bf16.gmra.mxu0 %v329
        %v1937 = vpop.f32.mrf.mxu0
        %v1938 = vadd.f32 0.0, %v1937
        %v1939 = vpop.f32.mrf.mxu0
        %v1940 = vadd.f32 0.0, %v1939
        %1941 = vmatmul.bf16.gmra.mxu0 %v330
        %v1942 = vpop.f32.mrf.mxu0
        %v1943 = vadd.f32 0.0, %v1942
        %v1944 = vpop.f32.mrf.mxu0
        %v1945 = vadd.f32 0.0, %v1944
        %1946 = vmatmul.bf16.gmra.mxu0 %v331
        %v1947 = vpop.f32.mrf.mxu0
        %v1948 = vadd.f32 0.0, %v1947
        %v1949 = vpop.f32.mrf.mxu0
        %v1950 = vadd.f32 0.0, %v1949
        %1951 = vmatmul.bf16.gmra.mxu0 %v1818
        %v1952 = vpop.f32.mrf.mxu0
        %v1953 = vadd.f32 0.0, %v1952
        %v1954 = vpop.f32.mrf.mxu0
        %v1955 = vadd.f32 0.0, %v1954
        %1956 = vdwg.mxu0
        %v1957 = vadd.f32 %v1767, %v1878
        %v1958 = vadd.f32 %v1768, %v1880
        %v1959 = vadd.f32 %v1769, %v1883
        %v1960 = vadd.f32 %v1770, %v1885
        %v1961 = vadd.f32 %v1771, %v1888
        %v1962 = vadd.f32 %v1772, %v1890
        %v1963 = vadd.f32 %v1773, %v1893
        %v1964 = vadd.f32 %v1774, %v1895
        %v1965 = vadd.f32 %v1775, %v1898
        %v1966 = vadd.f32 %v1776, %v1900
        %v1967 = vadd.f32 %v1777, %v1903
        %v1968 = vadd.f32 %v1778, %v1905
        %v1969 = vadd.f32 %v1779, %v1908
        %v1970 = vadd.f32 %v1780, %v1910
        %v1971 = vadd.f32 %v1781, %v1913
        %v1972 = vadd.f32 %v1782, %v1915
        %v1973 = vadd.f32 %v1783, %v1918
        %v1974 = vadd.f32 %v1784, %v1920
        %v1975 = vadd.f32 %v1785, %v1923
        %v1976 = vadd.f32 %v1786, %v1925
        %v1977 = vadd.f32 %v1787, %v1928
        %v1978 = vadd.f32 %v1788, %v1930
        %v1979 = vadd.f32 %v1789, %v1933
        %v1980 = vadd.f32 %v1790, %v1935
        %v1981 = vadd.f32 %v1791, %v1938
        %v1982 = vadd.f32 %v1792, %v1940
        %v1983 = vadd.f32 %v1793, %v1943
        %v1984 = vadd.f32 %v1794, %v1945
        %v1985 = vadd.f32 %v1795, %v1948
        %v1986 = vadd.f32 %v1796, %v1950
        %v1987 = vadd.f32 %v1797, %v1953
        %v1988 = vadd.f32 %v1798, %v1955
        %s1989 = scalar_lea.vmem [#allocation5], 512
        %v1990 = vld [vmem:[%s1989] sm:$0xf]
        %v1991 = vld [vmem:[%s1989 + $0x4] sm:$0xf]
        %v1992 = vld [vmem:[%s1989 + $0x8] sm:$0xf]
        %v1993 = vld [vmem:[%s1989 + $0xc] sm:$0xf]
        %v1994 = vld [vmem:[%s1989 + $0x10] sm:$0xf]
        %v1995 = vld [vmem:[%s1989 + $0x14] sm:$0xf]
        %v1996 = vld [vmem:[%s1989 + $0x18] sm:$0xf]
        %v1997 = vld [vmem:[%s1989 + $0x1c] sm:$0xf]
        %v1998 = vld [vmem:[%s1989 + $0x20] sm:$0xf]
        %v1999 = vld [vmem:[%s1989 + $0x24] sm:$0xf]
        %v2000 = vld [vmem:[%s1989 + $0x28] sm:$0xf]
        %v2001 = vld [vmem:[%s1989 + $0x2c] sm:$0xf]
        %v2002 = vld [vmem:[%s1989 + $0x30] sm:$0xf]
        %v2003 = vld [vmem:[%s1989 + $0x34] sm:$0xf]
        %v2004 = vld [vmem:[%s1989 + $0x38] sm:$0xf]
        %v2005 = vld [vmem:[%s1989 + $0x3c] sm:$0xf]
        %v2022 = vunpack.c.l.b16 %v1990
        %v2023 = vunpack.c.l.b16 %v1991
        %v2024 = vunpack.c.l.b16 %v1992
        %v2025 = vunpack.c.l.b16 %v1993
        %v2026 = vunpack.c.l.b16 %v1994
        %v2027 = vunpack.c.l.b16 %v1995
        %v2028 = vunpack.c.l.b16 %v1996
        %v2029 = vunpack.c.l.b16 %v1997
        %v2030 = vunpack.c.l.b16 %v1998
        %v2031 = vunpack.c.l.b16 %v1999
        %v2032 = vunpack.c.l.b16 %v2000
        %v2033 = vunpack.c.l.b16 %v2001
        %v2034 = vunpack.c.l.b16 %v2002
        %v2035 = vunpack.c.l.b16 %v2003
        %v2036 = vunpack.c.l.b16 %v2004
        %v2037 = vunpack.c.l.b16 %v2005
        %v2038 = vpack.c.b16 %v2023, %v2022
        %v2039 = vpack.c.b16 %v2025, %v2024
        %v2040 = vpack.c.b16 %v2027, %v2026
        %v2041 = vpack.c.b16 %v2029, %v2028
        %v2042 = vpack.c.b16 %v2031, %v2030
        %v2043 = vpack.c.b16 %v2033, %v2032
        %v2044 = vpack.c.b16 %v2035, %v2034
        %v2045 = vpack.c.b16 %v2037, %v2036
        %2054 = vmatpush.bf16.msra.mxu0 %v2045
        %2055 = vmatpush.bf16.msra.mxu0 %v2044
        %2056 = vmatpush.bf16.msra.mxu0 %v2043
        %2057 = vmatpush.bf16.msra.mxu0 %v2042
        %2058 = vmatpush.bf16.msra.mxu0 %v2041
        %2059 = vmatpush.bf16.msra.mxu0 %v2040
        %2060 = vmatpush.bf16.msra.mxu0 %v2039
        %2061 = vmatpush.bf16.msra.mxu0 %v2038
        %2062 = vmatmul.bf16.gmra.mxu0 %v531
        %v2063 = vpop.f32.mrf.mxu0
        %v2064 = vadd.f32 0.0, %v2063
        %v2065 = vpop.f32.mrf.mxu0
        %v2066 = vadd.f32 0.0, %v2065
        %2067 = vmatmul.bf16.gmra.mxu0 %v532
        %v2068 = vpop.f32.mrf.mxu0
        %v2069 = vadd.f32 0.0, %v2068
        %v2070 = vpop.f32.mrf.mxu0
        %v2071 = vadd.f32 0.0, %v2070
        %2072 = vmatmul.bf16.gmra.mxu0 %v533
        %v2073 = vpop.f32.mrf.mxu0
        %v2074 = vadd.f32 0.0, %v2073
        %v2075 = vpop.f32.mrf.mxu0
        %v2076 = vadd.f32 0.0, %v2075
        %2077 = vmatmul.bf16.gmra.mxu0 %v534
        %v2078 = vpop.f32.mrf.mxu0
        %v2079 = vadd.f32 0.0, %v2078
        %v2080 = vpop.f32.mrf.mxu0
        %v2081 = vadd.f32 0.0, %v2080
        %2082 = vmatmul.bf16.gmra.mxu0 %v535
        %v2083 = vpop.f32.mrf.mxu0
        %v2084 = vadd.f32 0.0, %v2083
        %v2085 = vpop.f32.mrf.mxu0
        %v2086 = vadd.f32 0.0, %v2085
        %2087 = vmatmul.bf16.gmra.mxu0 %v536
        %v2088 = vpop.f32.mrf.mxu0
        %v2089 = vadd.f32 0.0, %v2088
        %v2090 = vpop.f32.mrf.mxu0
        %v2091 = vadd.f32 0.0, %v2090
        %2092 = vmatmul.bf16.gmra.mxu0 %v537
        %v2093 = vpop.f32.mrf.mxu0
        %v2094 = vadd.f32 0.0, %v2093
        %v2095 = vpop.f32.mrf.mxu0
        %v2096 = vadd.f32 0.0, %v2095
        %2097 = vmatmul.bf16.gmra.mxu0 %v538
        %v2098 = vpop.f32.mrf.mxu0
        %v2099 = vadd.f32 0.0, %v2098
        %v2100 = vpop.f32.mrf.mxu0
        %v2101 = vadd.f32 0.0, %v2100
        %2102 = vmatmul.bf16.gmra.mxu0 %v539
        %v2103 = vpop.f32.mrf.mxu0
        %v2104 = vadd.f32 0.0, %v2103
        %v2105 = vpop.f32.mrf.mxu0
        %v2106 = vadd.f32 0.0, %v2105
        %2107 = vmatmul.bf16.gmra.mxu0 %v540
        %v2108 = vpop.f32.mrf.mxu0
        %v2109 = vadd.f32 0.0, %v2108
        %v2110 = vpop.f32.mrf.mxu0
        %v2111 = vadd.f32 0.0, %v2110
        %2112 = vmatmul.bf16.gmra.mxu0 %v541
        %v2113 = vpop.f32.mrf.mxu0
        %v2114 = vadd.f32 0.0, %v2113
        %v2115 = vpop.f32.mrf.mxu0
        %v2116 = vadd.f32 0.0, %v2115
        %2117 = vmatmul.bf16.gmra.mxu0 %v542
        %v2118 = vpop.f32.mrf.mxu0
        %v2119 = vadd.f32 0.0, %v2118
        %v2120 = vpop.f32.mrf.mxu0
        %v2121 = vadd.f32 0.0, %v2120
        %2122 = vmatmul.bf16.gmra.mxu0 %v543
        %v2123 = vpop.f32.mrf.mxu0
        %v2124 = vadd.f32 0.0, %v2123
        %v2125 = vpop.f32.mrf.mxu0
        %v2126 = vadd.f32 0.0, %v2125
        %2127 = vmatmul.bf16.gmra.mxu0 %v544
        %v2128 = vpop.f32.mrf.mxu0
        %v2129 = vadd.f32 0.0, %v2128
        %v2130 = vpop.f32.mrf.mxu0
        %v2131 = vadd.f32 0.0, %v2130
        %2132 = vmatmul.bf16.gmra.mxu0 %v545
        %v2133 = vpop.f32.mrf.mxu0
        %v2134 = vadd.f32 0.0, %v2133
        %v2135 = vpop.f32.mrf.mxu0
        %v2136 = vadd.f32 0.0, %v2135
        %2137 = vmatmul.bf16.gmra.mxu0 0
        %v2138 = vpop.f32.mrf.mxu0
        %v2139 = vadd.f32 0.0, %v2138
        %v2140 = vpop.f32.mrf.mxu0
        %v2141 = vadd.f32 0.0, %v2140
        %2142 = vdwg.mxu0
        %v2143 = vadd.f32 %v1957, %v2064
        %v2144 = vadd.f32 %v1958, %v2066
        %v2145 = vadd.f32 %v1959, %v2069
        %v2146 = vadd.f32 %v1960, %v2071
        %v2147 = vadd.f32 %v1961, %v2074
        %v2148 = vadd.f32 %v1962, %v2076
        %v2149 = vadd.f32 %v1963, %v2079
        %v2150 = vadd.f32 %v1964, %v2081
        %v2151 = vadd.f32 %v1965, %v2084
        %v2152 = vadd.f32 %v1966, %v2086
        %v2153 = vadd.f32 %v1967, %v2089
        %v2154 = vadd.f32 %v1968, %v2091
        %v2155 = vadd.f32 %v1969, %v2094
        %v2156 = vadd.f32 %v1970, %v2096
        %v2157 = vadd.f32 %v1971, %v2099
        %v2158 = vadd.f32 %v1972, %v2101
        %v2159 = vadd.f32 %v1973, %v2104
        %v2160 = vadd.f32 %v1974, %v2106
        %v2161 = vadd.f32 %v1975, %v2109
        %v2162 = vadd.f32 %v1976, %v2111
        %v2163 = vadd.f32 %v1977, %v2114
        %v2164 = vadd.f32 %v1978, %v2116
        %v2165 = vadd.f32 %v1979, %v2119
        %v2166 = vadd.f32 %v1980, %v2121
        %v2167 = vadd.f32 %v1981, %v2124
        %v2168 = vadd.f32 %v1982, %v2126
        %v2169 = vadd.f32 %v1983, %v2129
        %v2170 = vadd.f32 %v1984, %v2131
        %v2171 = vadd.f32 %v1985, %v2134
        %v2172 = vadd.f32 %v1986, %v2136
        %v2173 = vadd.f32 %v1987, %v2139
        %v2174 = vadd.f32 %v1988, %v2141
        %v2175 = vadd.f32 %v2143, %v2144
        %v2176 = vadd.f32 %v2175, %v2145
        %v2177 = vadd.f32 %v2176, %v2146
        %v2178 = vadd.f32 %v2177, %v2147
        %v2179 = vadd.f32 %v2178, %v2148
        %v2180 = vadd.f32 %v2179, %v2149
        %v2181 = vadd.f32 %v2180, %v2150
        %v2182 = vadd.f32 %v2181, %v2151
        %v2183 = vadd.f32 %v2182, %v2152
        %v2184 = vadd.f32 %v2183, %v2153
        %v2185 = vadd.f32 %v2184, %v2154
        %v2186 = vadd.f32 %v2185, %v2155
        %v2187 = vadd.f32 %v2186, %v2156
        %v2188 = vadd.f32 %v2187, %v2157
        %v2189 = vadd.f32 %v2188, %v2158
        %v2190 = vadd.f32 %v2189, %v2159
        %v2191 = vadd.f32 %v2190, %v2160
        %v2192 = vadd.f32 %v2191, %v2161
        %v2193 = vadd.f32 %v2192, %v2162
        %v2194 = vadd.f32 %v2193, %v2163
        %v2195 = vadd.f32 %v2194, %v2164
        %v2196 = vadd.f32 %v2195, %v2165
        %v2197 = vadd.f32 %v2196, %v2166
        %v2198 = vadd.f32 %v2197, %v2167
        %v2199 = vadd.f32 %v2198, %v2168
        %v2200 = vadd.f32 %v2199, %v2169
        %v2201 = vadd.f32 %v2200, %v2170
        %v2202 = vadd.f32 %v2201, %v2171
        %v2203 = vadd.f32 %v2202, %v2172
        %v2204 = vadd.f32 %v2203, %v2173
        %v2205 = vadd.f32 %v2204, %v2174
        %v2206 = vrot.slane %v2205, 4
        %v2207 = vadd.f32 %v2205, %v2206
        %v2208 = vrot.slane %v2207, 2
        %v2209 = vadd.f32 %v2207, %v2208
        %v2210 = vrot.slane %v2209, 1
        %v2211 = vadd.f32 %v2209, %v2210
        %v2212 = vrcp.pop 256.0
        %v2213 = vmul.f32 256.0, %v2212
        %v2214 = vsub.f32 1.0, %v2213
        %v2215 = vmul.f32 %v2212, %v2214
        %v2216 = vadd.f32 %v2212, %v2215
        %vm2217 = vweird.f32 %v2212
        %v2218 = vsel %vm2217, %v2212, %v2216
        %v2219 = vmul.f32 %v2211, %v2218
        %v2220 = vsub.f32 %v2143, %v2219
        %v2221 = vsub.f32 %v2144, %v2219
        %v2222 = vsub.f32 %v2145, %v2219
        %v2223 = vsub.f32 %v2146, %v2219
        %v2224 = vsub.f32 %v2147, %v2219
        %v2225 = vsub.f32 %v2148, %v2219
        %v2226 = vsub.f32 %v2149, %v2219
        %v2227 = vsub.f32 %v2150, %v2219
        %v2228 = vsub.f32 %v2151, %v2219
        %v2229 = vsub.f32 %v2152, %v2219
        %v2230 = vsub.f32 %v2153, %v2219
        %v2231 = vsub.f32 %v2154, %v2219
        %v2232 = vsub.f32 %v2155, %v2219
        %v2233 = vsub.f32 %v2156, %v2219
        %v2234 = vsub.f32 %v2157, %v2219
        %v2235 = vsub.f32 %v2158, %v2219
        %v2236 = vsub.f32 %v2159, %v2219
        %v2237 = vsub.f32 %v2160, %v2219
        %v2238 = vsub.f32 %v2161, %v2219
        %v2239 = vsub.f32 %v2162, %v2219
        %v2240 = vsub.f32 %v2163, %v2219
        %v2241 = vsub.f32 %v2164, %v2219
        %v2242 = vsub.f32 %v2165, %v2219
        %v2243 = vsub.f32 %v2166, %v2219
        %v2244 = vsub.f32 %v2167, %v2219
        %v2245 = vsub.f32 %v2168, %v2219
        %v2246 = vsub.f32 %v2169, %v2219
        %v2247 = vsub.f32 %v2170, %v2219
        %v2248 = vsub.f32 %v2171, %v2219
        %v2249 = vsub.f32 %v2172, %v2219
        %v2250 = vsub.f32 %v2173, %v2219
        %v2251 = vsub.f32 %v2174, %v2219
        %v2252 = vmul.f32 %v2220, %v2220
        %v2253 = vmul.f32 %v2221, %v2221
        %v2254 = vmul.f32 %v2222, %v2222
        %v2255 = vmul.f32 %v2223, %v2223
        %v2256 = vmul.f32 %v2224, %v2224
        %v2257 = vmul.f32 %v2225, %v2225
        %v2258 = vmul.f32 %v2226, %v2226
        %v2259 = vmul.f32 %v2227, %v2227
        %v2260 = vmul.f32 %v2228, %v2228
        %v2261 = vmul.f32 %v2229, %v2229
        %v2262 = vmul.f32 %v2230, %v2230
        %v2263 = vmul.f32 %v2231, %v2231
        %v2264 = vmul.f32 %v2232, %v2232
        %v2265 = vmul.f32 %v2233, %v2233
        %v2266 = vmul.f32 %v2234, %v2234
        %v2267 = vmul.f32 %v2235, %v2235
        %v2268 = vmul.f32 %v2236, %v2236
        %v2269 = vmul.f32 %v2237, %v2237
        %v2270 = vmul.f32 %v2238, %v2238
        %v2271 = vmul.f32 %v2239, %v2239
        %v2272 = vmul.f32 %v2240, %v2240
        %v2273 = vmul.f32 %v2241, %v2241
        %v2274 = vmul.f32 %v2242, %v2242
        %v2275 = vmul.f32 %v2243, %v2243
        %v2276 = vmul.f32 %v2244, %v2244
        %v2277 = vmul.f32 %v2245, %v2245
        %v2278 = vmul.f32 %v2246, %v2246
        %v2279 = vmul.f32 %v2247, %v2247
        %v2280 = vmul.f32 %v2248, %v2248
        %v2281 = vmul.f32 %v2249, %v2249
        %v2282 = vmul.f32 %v2250, %v2250
        %v2283 = vmul.f32 %v2251, %v2251
        %v2284 = vadd.f32 %v2252, %v2253
        %v2285 = vadd.f32 %v2284, %v2254
        %v2286 = vadd.f32 %v2285, %v2255
        %v2287 = vadd.f32 %v2286, %v2256
        %v2288 = vadd.f32 %v2287, %v2257
        %v2289 = vadd.f32 %v2288, %v2258
        %v2290 = vadd.f32 %v2289, %v2259
        %v2291 = vadd.f32 %v2290, %v2260
        %v2292 = vadd.f32 %v2291, %v2261
        %v2293 = vadd.f32 %v2292, %v2262
        %v2294 = vadd.f32 %v2293, %v2263
        %v2295 = vadd.f32 %v2294, %v2264
        %v2296 = vadd.f32 %v2295, %v2265
        %v2297 = vadd.f32 %v2296, %v2266
        %v2298 = vadd.f32 %v2297, %v2267
        %v2299 = vadd.f32 %v2298, %v2268
        %v2300 = vadd.f32 %v2299, %v2269
        %v2301 = vadd.f32 %v2300, %v2270
        %v2302 = vadd.f32 %v2301, %v2271
        %v2303 = vadd.f32 %v2302, %v2272
        %v2304 = vadd.f32 %v2303, %v2273
        %v2305 = vadd.f32 %v2304, %v2274
        %v2306 = vadd.f32 %v2305, %v2275
        %v2307 = vadd.f32 %v2306, %v2276
        %v2308 = vadd.f32 %v2307, %v2277
        %v2309 = vadd.f32 %v2308, %v2278
        %v2310 = vadd.f32 %v2309, %v2279
        %v2311 = vadd.f32 %v2310, %v2280
        %v2312 = vadd.f32 %v2311, %v2281
        %v2313 = vadd.f32 %v2312, %v2282
        %v2314 = vadd.f32 %v2313, %v2283
        %v2315 = vrot.slane %v2314, 4
        %v2316 = vadd.f32 %v2314, %v2315
        %v2317 = vrot.slane %v2316, 2
        %v2318 = vadd.f32 %v2316, %v2317
        %v2319 = vrot.slane %v2318, 1
        %v2320 = vadd.f32 %v2318, %v2319
        %vm2321 = vcmask 1040384
        %v2322 = vsel %vm2321, %v2219, %v2320
        %vm2323 = vcmask 1041408
        %v2324 = vsel %vm2323, %v2322, 0.0
        %2325 = vst [vmem:[%s218] sm:$0xff] %v2324
        %v2326 = vpack.c.bf16 %v2143, %v2143
        %v2327 = vpack.c.bf16 %v2144, %v2144
        %v2328 = vpack.c.bf16 %v2145, %v2145
        %v2329 = vpack.c.bf16 %v2146, %v2146
        %v2330 = vpack.c.bf16 %v2147, %v2147
        %v2331 = vpack.c.bf16 %v2148, %v2148
        %v2332 = vpack.c.bf16 %v2149, %v2149
        %v2333 = vpack.c.bf16 %v2150, %v2150
        %v2334 = vpack.c.bf16 %v2151, %v2151
        %v2335 = vpack.c.bf16 %v2152, %v2152
        %v2336 = vpack.c.bf16 %v2153, %v2153
        %v2337 = vpack.c.bf16 %v2154, %v2154
        %v2338 = vpack.c.bf16 %v2155, %v2155
        %v2339 = vpack.c.bf16 %v2156, %v2156
        %v2340 = vpack.c.bf16 %v2157, %v2157
        %v2341 = vpack.c.bf16 %v2158, %v2158
        %v2342 = vpack.c.bf16 %v2159, %v2159
        %v2343 = vpack.c.bf16 %v2160, %v2160
        %v2344 = vpack.c.bf16 %v2161, %v2161
        %v2345 = vpack.c.bf16 %v2162, %v2162
        %v2346 = vpack.c.bf16 %v2163, %v2163
        %v2347 = vpack.c.bf16 %v2164, %v2164
        %v2348 = vpack.c.bf16 %v2165, %v2165
        %v2349 = vpack.c.bf16 %v2166, %v2166
        %v2350 = vpack.c.bf16 %v2167, %v2167
        %v2351 = vpack.c.bf16 %v2168, %v2168
        %v2352 = vpack.c.bf16 %v2169, %v2169
        %v2353 = vpack.c.bf16 %v2170, %v2170
        %v2354 = vpack.c.bf16 %v2171, %v2171
        %v2355 = vpack.c.bf16 %v2172, %v2172
        %v2356 = vpack.c.bf16 %v2173, %v2173
        %v2357 = vpack.c.bf16 %v2174, %v2174
        %2358 = vst [vmem:[%s211] sm:$0xf] %v2326
        %2359 = vst [vmem:[%s211 + $0x4] sm:$0xf] %v2327
        %2360 = vst [vmem:[%s211 + $0x8] sm:$0xf] %v2328
        %2361 = vst [vmem:[%s211 + $0xc] sm:$0xf] %v2329
        %2362 = vst [vmem:[%s211 + $0x10] sm:$0xf] %v2330
        %2363 = vst [vmem:[%s211 + $0x14] sm:$0xf] %v2331
        %2364 = vst [vmem:[%s211 + $0x18] sm:$0xf] %v2332
        %2365 = vst [vmem:[%s211 + $0x1c] sm:$0xf] %v2333
        %2366 = vst [vmem:[%s211 + $0x20] sm:$0xf] %v2334
        %2367 = vst [vmem:[%s211 + $0x24] sm:$0xf] %v2335
        %2368 = vst [vmem:[%s211 + $0x28] sm:$0xf] %v2336
        %2369 = vst [vmem:[%s211 + $0x2c] sm:$0xf] %v2337
        %2370 = vst [vmem:[%s211 + $0x30] sm:$0xf] %v2338
        %2371 = vst [vmem:[%s211 + $0x34] sm:$0xf] %v2339
        %2372 = vst [vmem:[%s211 + $0x38] sm:$0xf] %v2340
        %2373 = vst [vmem:[%s211 + $0x3c] sm:$0xf] %v2341
        %2374 = vst [vmem:[%s211 + $0x40] sm:$0xf] %v2342
        %2375 = vst [vmem:[%s211 + $0x44] sm:$0xf] %v2343
        %2376 = vst [vmem:[%s211 + $0x48] sm:$0xf] %v2344
        %2377 = vst [vmem:[%s211 + $0x4c] sm:$0xf] %v2345
        %2378 = vst [vmem:[%s211 + $0x50] sm:$0xf] %v2346
        %2379 = vst [vmem:[%s211 + $0x54] sm:$0xf] %v2347
        %2380 = vst [vmem:[%s211 + $0x58] sm:$0xf] %v2348
        %2381 = vst [vmem:[%s211 + $0x5c] sm:$0xf] %v2349
        %2382 = vst [vmem:[%s211 + $0x60] sm:$0xf] %v2350
        %2383 = vst [vmem:[%s211 + $0x64] sm:$0xf] %v2351
        %2384 = vst [vmem:[%s211 + $0x68] sm:$0xf] %v2352
        %2385 = vst [vmem:[%s211 + $0x6c] sm:$0xf] %v2353
        %2386 = vst [vmem:[%s211 + $0x70] sm:$0xf] %v2354
        %2387 = vst [vmem:[%s211 + $0x74] sm:$0xf] %v2355
        %2388 = vst [vmem:[%s211 + $0x78] sm:$0xf] %v2356
        %2389 = vst [vmem:[%s211 + $0x7c] sm:$0xf] %v2357
        %s2390 = sand.u32 %s80, 1
        %s2391 = scalar_lea.sflag [#allocation4], %s2390
        %s2392 = sand.u32 %s80, 1
        %s2393 = smul.addr %s2392, 128
        %s2394 = scalar_lea.vmem [#allocation7], %s2393
        %s2395 = sand.u32 %s106, 1
        %s2396 = scalar_lea.sflag [#allocation9], %s2395
        %s2397 = sand.u32 %s106, 1
        %s2398 = smul.addr %s2397, 8
        %s2399 = scalar_lea.vmem [#allocation8], %s2398
        // Predicated region
        $region37: #{tpu_custom_call.1} parent=27 // pred_check
          %p2400 = pneg %p90
        $region38: #{tpu_custom_call.1} parent=27 // pred_check_branch
          %2402 = sbr.rel (%p2400) target = $region40
        $region39: #{tpu_custom_call.1} parent=27 // pred_region
          %2404 = vsyncadd %s2391, 0
          %s2405 = smul.addr %s25, 32
          %s2406 = smul.addr %s2405, 4
          %s2407 = scalar_lea.hbm %s2, %s2406
          %s2408 = sshll.u32 %s2394, 4
          %s2409 = int_to_ptr.vmem [resolvable:$true] %s2408
          %s2410 = sshll.u32 %s2407, 4
          %s2411 = int_to_ptr.hbm [resolvable:$true] %s2410
          %2416 = dma.vmem_to_hbm [thread:$0]  %s2409, 2048, %s2411, %s2391, 64, 64, 4
        $region40: #{tpu_custom_call.1} parent=27 // pred_fallthru
          _
        // Predicated region
        $region41: #{tpu_custom_call.1} parent=27 // pred_check
          %p2417 = pneg %p116
        $region42: #{tpu_custom_call.1} parent=27 // pred_check_branch
          %2419 = sbr.rel (%p2417) target = $region44
        $region43: #{tpu_custom_call.1} parent=27 // pred_region
          %2421 = vsyncadd %s2396, 0
          %s2422 = smul.addr %s25, 8
          %s2423 = scalar_lea.hbm %s3, %s2422
          %s2425 = sshll.u32 %s2399, 4
          %s2426 = int_to_ptr.vmem [resolvable:$true] %s2425
          %s2427 = sshll.u32 %s2423, 4
          %s2428 = int_to_ptr.hbm [resolvable:$true] %s2427
          %2430 = dma.vmem_to_hbm [thread:$0]  %s2426, 128, %s2428, %s2396
        $region44: #{tpu_custom_call.1} parent=27 // pred_fallthru
          _
      $region28: #{tpu_custom_call.1} parent=5 // pred_fallthru
        _
      %p2431 = scmp.le.s32.totalorder 2, %s20
      // Predicated region
      $region45: #{tpu_custom_call.1} parent=5 // pred_check
        %p2432 = pneg %p2431
      $region46: #{tpu_custom_call.1} parent=5 // pred_check_branch
        %2434 = sbr.rel (%p2432) target = $region48
      $region47: #{tpu_custom_call.1} parent=5 // pred_region
        %s2435 = ssub.s32 %s20, 2
        // Predicated region
        $region49: #{tpu_custom_call.1} parent=47 // pred_check
          %p2436 = pneg %p96
        $region50: #{tpu_custom_call.1} parent=47 // pred_check_branch
          %2438 = sbr.rel (%p2436) target = $region52
        $region51: #{tpu_custom_call.1} parent=47 // pred_region
          %s2439 = sand.u32 %s81, 1
          %s2440 = scalar_lea.sflag [#allocation4], %s2439
          %s2441 = sand.u32 %s81, 1
          %s2442 = smul.addr %s2441, 128
          %s2443 = scalar_lea.vmem [#allocation7], %s2442
          %2445 = dma.done %s2440, 2048
        $region52: #{tpu_custom_call.1} parent=47 // pred_fallthru
          _
        // Predicated region
        $region53: #{tpu_custom_call.1} parent=47 // pred_check
          %p2446 = pneg %p122
        $region54: #{tpu_custom_call.1} parent=47 // pred_check_branch
          %2448 = sbr.rel (%p2446) target = $region56
        $region55: #{tpu_custom_call.1} parent=47 // pred_region
          %s2449 = sand.u32 %s107, 1
          %s2450 = scalar_lea.sflag [#allocation9], %s2449
          %s2451 = sand.u32 %s107, 1
          %s2452 = smul.addr %s2451, 8
          %s2453 = scalar_lea.vmem [#allocation8], %s2452
          %2455 = dma.done %s2450, 128
        $region56: #{tpu_custom_call.1} parent=47 // pred_fallthru
          _
      $region48: #{tpu_custom_call.1} parent=5 // pred_fallthru
        _
    $region6: #{tpu_custom_call.1} parent=1 // loop_footer
      %s24 = sadd.s32 1, %s20
    $region7: #{tpu_custom_call.1} parent=1 // loop_footer_branch
      %19 = sbr.rel target = $region3
    $region8: #{tpu_custom_call.1} parent=1 // loop_exit
      _
    %2456 = vsyncpa [#allocation3], 1
    %s2457 = scalar_lea.sflag [#allocation3], 1
    %2458 = vsyncpa %s2457, 1
    %2459 = vsyncpa [#allocation6], 1
    %2460 = vsyncpa [#allocation4], 1
    %s2461 = scalar_lea.sflag [#allocation4], 1
    %2462 = vsyncpa %s2461, 1
    %2463 = vsyncpa [#allocation9], 1
    %s2464 = scalar_lea.sflag [#allocation9], 1
    %2465 = vsyncpa %s2464, 1

</llo_original>
